<compile_context>
chip_gen: v7x
topology: tpu7x:2x2x1
jax: 0.10.0
libtpu: 0.0.40
codegen_flags: <defaults>
</compile_context>

<pallas_src>
import jax
import jax.numpy as jnp
from jax import lax
from jax.experimental import pallas as pl
from jax.experimental.pallas import tpu as pltpu


def _make_feature_kernel(tb, H, W, Cin, KH, KW, cout_p):
    HW = H * W

    def kernel(x_ref, w_ref, b_ref, o_ref):
        # x_ref: (tb, H+2p, W+2p, Cin) bf16 -- raw zero-padded images (NHWC)
        # w_ref: (KH*KW, Cin, cout_p)  bf16 -- per-tap weight slices, Cout padded
        # b_ref: (1, cout_p)           f32
        # o_ref: (tb, cout_p)          f32  -- pooled + flattened features
        x = x_ref[...]                                        # (tb, Hp, Wp, Cin)

        # 3x3 conv as 9 shifted GEMMs, unrolled at trace time, f32 accumulator.
        acc = jnp.zeros((tb * HW, cout_p), jnp.float32)
        for t in range(KH * KW):
            i, j = t // KW, t % KW
            # (tb, H, W, Cin) -> (tb*HW, Cin); W is a multiple of the sublane
            # tiling (16 for bf16) so this leading-dim collapse is
            # layout-preserving (no relayout copy).
            patch = x[:, i:i + H, j:j + W, :].reshape(tb * HW, Cin)
            acc = acc + jnp.dot(patch, w_ref[t],
                                preferred_element_type=jnp.float32)

        acc = jnp.maximum(acc + b_ref[...], 0.0)              # bias + ReLU (f32)

        # Global average pool (AdaptiveAvgPool2d(1)) per image; lane-dense
        # (1, cout_p) row stores into the (tb, cout_p) output block.
        for b in range(tb):
            rows = acc[b * HW:(b + 1) * HW, :]                # (HW, cout_p)
            o_ref[b:b + 1, :] = jnp.mean(rows, axis=0,
                                         keepdims=True).astype(o_ref.dtype)

    return kernel


def feature_extractor_forward(x_nchw, weight, bias, *, tb=None):
    """x_nchw: (B, Cin, H, W); weight: (Cout, Cin, KH, KW); bias: (Cout,).

    Returns (B, Cout) == features(x).view(B, -1).
    """
    B, Cin, H, W = x_nchw.shape
    Cout, wc, KH, KW = weight.shape
    assert wc == Cin and KH % 2 == 1 and KW % 2 == 1
    pad = (KH - 1) // 2                      # 'same' padding (Conv2d padding=1)
    Hp, Wp = H + 2 * pad, W + 2 * pad

    if tb is None:
        # >=2 grid steps when B >= 2 (keeps both v7x TensorCores busy) while
        # still batching several images per step for larger B; cap for VMEM.
        tb = min(max(1, B // 2), 8)
    G = (B + tb - 1) // tb                   # grid steps
    Bp = G * tb                              # padded batch

    cout_p = ((Cout + 127) // 128) * 128     # lane-dense weight / output tiles

    # --- wrapper-side layout plumbing (cheap, ~1x raw image bytes) ---------
    # NCHW -> NHWC, spatial zero-pad, batch pad, bf16.
    x = jnp.transpose(x_nchw, (0, 2, 3, 1))
    x = jnp.pad(x, ((0, Bp - B), (pad, pad), (pad, pad), (0, 0)))
    x = x.astype(jnp.bfloat16)

    # weight[o, c, i, j] -> w9[i*KW+j, c, o], zero-padded along Cout, bf16.
    w9 = jnp.transpose(weight, (2, 3, 1, 0)).reshape(KH * KW, Cin, Cout)
    w9 = jnp.pad(w9, ((0, 0), (0, 0), (0, cout_p - Cout))).astype(jnp.bfloat16)

    b_mat = jnp.pad(bias.astype(jnp.float32),
                    (0, cout_p - Cout)).reshape(1, cout_p)

    kernel = _make_feature_kernel(tb, H, W, Cin, KH, KW, cout_p)

    out3 = pl.pallas_call(
        kernel,
        out_shape=jax.ShapeDtypeStruct((G, tb, cout_p), jnp.float32),
        grid_spec=pltpu.PrefetchScalarGridSpec(
            num_scalar_prefetch=0,
            grid=(G,),
            in_specs=[
                # Last-two block dims equal the full array dims for every
                # operand -> no (8,128) divisibility hazards.
                pl.BlockSpec((tb, Hp, Wp, Cin), lambda g: (g, 0, 0, 0)),
                pl.BlockSpec((KH * KW, Cin, cout_p), lambda g: (0, 0, 0)),
                pl.BlockSpec((1, cout_p), lambda g: (0, 0)),
            ],
            out_specs=pl.BlockSpec((None, tb, cout_p), lambda g: (g, 0, 0)),
        ),
        compiler_params=pltpu.CompilerParams(
            dimension_semantics=("parallel",)),
    )(x, w9, b_mat)

    return out3.reshape(Bp, cout_p)[:B, :Cout]


def _reference_forward(x_nchw, weight, bias):
    """Pure-JAX reference: conv(3x3, pad=1) -> ReLU -> global avg pool -> flatten."""
    y = lax.conv_general_dilated(
        x_nchw.astype(jnp.float32), weight.astype(jnp.float32),
        window_strides=(1, 1), padding=((1, 1), (1, 1)),
        dimension_numbers=("NCHW", "OIHW", "NCHW"),
        precision=lax.Precision.HIGHEST)
    y = y + bias.reshape(1, -1, 1, 1)
    y = jnp.maximum(y, 0.0)
    return jnp.mean(y, axis=(2, 3))                           # (B, Cout)


if __name__ == "__main__":
    key = jax.random.PRNGKey(0)
    k_x, k_w, k_b = jax.random.split(key, 3)

    B, Cin, H, W = 2, 4, 16, 16
    Cout, KH, KW = 32, 3, 3

    x = jax.random.normal(k_x, (B, Cin, H, W), dtype=jnp.float32)
    weight = (jax.random.normal(k_w, (Cout, Cin, KH, KW), dtype=jnp.float32)
              * (1.0 / jnp.sqrt(Cin * KH * KW)))
    bias = jax.random.normal(k_b, (Cout,), dtype=jnp.float32) * 0.01

    out = jax.block_until_ready(feature_extractor_forward(x, weight, bias))
    assert out.shape == (B, Cout), out.shape

    # Tight check vs. a reference seeing the same bf16-quantized inputs
    # (isolates kernel correctness from the intentional bf16 input cast).
    ref_q = jax.block_until_ready(_reference_forward(
        x.astype(jnp.bfloat16).astype(jnp.float32),
        weight.astype(jnp.bfloat16).astype(jnp.float32), bias))
    err_q = float(jnp.max(jnp.abs(out - ref_q)))
    assert err_q < 1e-3, f"max abs err vs bf16-quantized ref {err_q}"

    # Loose check vs. the full-f32 module semantics (bf16 input rounding only).
    ref = jax.block_until_ready(_reference_forward(x, weight, bias))
    err = float(jnp.max(jnp.abs(out - ref)))
    assert err < 2e-2, f"max abs err vs f32 ref {err}"

    print("KERNEL_OK")
</pallas_src>

<mosaic_0001>
module attributes {stable_mosaic.version = 11 : i64} {
  func.func @kernel(%arg0: i32, %arg1: memref<1x18x18x4xbf16, #tpu.memory_space<vmem>>, %arg2: memref<9x4x128xbf16, #tpu.memory_space<vmem>>, %arg3: memref<1x128xf32, #tpu.memory_space<vmem>>, %arg4: memref<1x1x128xf32, #tpu.memory_space<vmem>>) attributes {dimension_semantics = [#tpu.dimension_semantics<parallel>], iteration_bounds = array<i64: 2>, scalar_prefetch = 0 : i64, scratch_operands = 0 : i64, tpu.core_type = #tpu.core_type<tc>, window_params = [{transform_indices = @transform_0, window_bounds = array<i64: 1, 18, 18, 4>}, {pipeline_mode = #tpu.pipeline_mode<synchronous>, transform_indices = @transform_1, window_bounds = array<i64: 9, 4, 128>}, {pipeline_mode = #tpu.pipeline_mode<synchronous>, transform_indices = @transform_2, window_bounds = array<i64: 1, 128>}, {transform_indices = @transform_3, window_bounds = array<i64: 1, 1, 128>}]} {
    %c0 = arith.constant 0 : index
    %c0_0 = arith.constant 0 : index
    %c0_1 = arith.constant 0 : index
    %c0_2 = arith.constant 0 : index
    %0 = vector.load %arg1[%c0, %c0_0, %c0_1, %c0_2] : memref<1x18x18x4xbf16, #tpu.memory_space<vmem>>, vector<1x18x18x4xbf16>
    %cst = arith.constant 0.000000e+00 : f32
    %1 = vector.broadcast %cst : f32 to vector<256x128xf32>
    %2 = vector.extract_strided_slice %0 {offsets = [0, 0, 0, 0], sizes = [1, 16, 16, 4], strides = [1, 1, 1, 1]} : vector<1x18x18x4xbf16> to vector<1x16x16x4xbf16>
    %3 = vector.shape_cast %2 : vector<1x16x16x4xbf16> to vector<256x4xbf16>
    %c0_3 = arith.constant 0 : index
    %c0_4 = arith.constant 0 : index
    %c0_5 = arith.constant 0 : index
    %4 = vector.load %arg2[%c0_3, %c0_4, %c0_5] : memref<9x4x128xbf16, #tpu.memory_space<vmem>>, vector<1x4x128xbf16>
    %5 = vector.shape_cast %4 : vector<1x4x128xbf16> to vector<4x128xbf16>
    %cst_6 = arith.constant dense<0.000000e+00> : vector<256x128xf32>
    %6 = tpu.matmul %3, %5, %cst_6 {dimension_numbers = #tpu.dot_dimension_numbers<[1], [0], [0], [1], [0, 0, 1, 1], [], []>} : vector<256x4xbf16>, vector<4x128xbf16>, vector<256x128xf32> -> vector<256x128xf32>
    %7 = arith.addf %1, %6 : vector<256x128xf32>
    %8 = vector.extract_strided_slice %0 {offsets = [0, 0, 1, 0], sizes = [1, 16, 16, 4], strides = [1, 1, 1, 1]} : vector<1x18x18x4xbf16> to vector<1x16x16x4xbf16>
    %9 = vector.shape_cast %8 : vector<1x16x16x4xbf16> to vector<256x4xbf16>
    %c1 = arith.constant 1 : index
    %c0_7 = arith.constant 0 : index
    %c0_8 = arith.constant 0 : index
    %10 = vector.load %arg2[%c1, %c0_7, %c0_8] : memref<9x4x128xbf16, #tpu.memory_space<vmem>>, vector<1x4x128xbf16>
    %11 = vector.shape_cast %10 : vector<1x4x128xbf16> to vector<4x128xbf16>
    %cst_9 = arith.constant dense<0.000000e+00> : vector<256x128xf32>
    %12 = tpu.matmul %9, %11, %cst_9 {dimension_numbers = #tpu.dot_dimension_numbers<[1], [0], [0], [1], [0, 0, 1, 1], [], []>} : vector<256x4xbf16>, vector<4x128xbf16>, vector<256x128xf32> -> vector<256x128xf32>
    %13 = arith.addf %7, %12 : vector<256x128xf32>
    %14 = vector.extract_strided_slice %0 {offsets = [0, 0, 2, 0], sizes = [1, 16, 16, 4], strides = [1, 1, 1, 1]} : vector<1x18x18x4xbf16> to vector<1x16x16x4xbf16>
    %15 = vector.shape_cast %14 : vector<1x16x16x4xbf16> to vector<256x4xbf16>
    %c2 = arith.constant 2 : index
    %c0_10 = arith.constant 0 : index
    %c0_11 = arith.constant 0 : index
    %16 = vector.load %arg2[%c2, %c0_10, %c0_11] : memref<9x4x128xbf16, #tpu.memory_space<vmem>>, vector<1x4x128xbf16>
    %17 = vector.shape_cast %16 : vector<1x4x128xbf16> to vector<4x128xbf16>
    %cst_12 = arith.constant dense<0.000000e+00> : vector<256x128xf32>
    %18 = tpu.matmul %15, %17, %cst_12 {dimension_numbers = #tpu.dot_dimension_numbers<[1], [0], [0], [1], [0, 0, 1, 1], [], []>} : vector<256x4xbf16>, vector<4x128xbf16>, vector<256x128xf32> -> vector<256x128xf32>
    %19 = arith.addf %13, %18 : vector<256x128xf32>
    %20 = vector.extract_strided_slice %0 {offsets = [0, 1, 0, 0], sizes = [1, 16, 16, 4], strides = [1, 1, 1, 1]} : vector<1x18x18x4xbf16> to vector<1x16x16x4xbf16>
    %21 = vector.shape_cast %20 : vector<1x16x16x4xbf16> to vector<256x4xbf16>
    %c3 = arith.constant 3 : index
    %c0_13 = arith.constant 0 : index
    %c0_14 = arith.constant 0 : index
    %22 = vector.load %arg2[%c3, %c0_13, %c0_14] : memref<9x4x128xbf16, #tpu.memory_space<vmem>>, vector<1x4x128xbf16>
    %23 = vector.shape_cast %22 : vector<1x4x128xbf16> to vector<4x128xbf16>
    %cst_15 = arith.constant dense<0.000000e+00> : vector<256x128xf32>
    %24 = tpu.matmul %21, %23, %cst_15 {dimension_numbers = #tpu.dot_dimension_numbers<[1], [0], [0], [1], [0, 0, 1, 1], [], []>} : vector<256x4xbf16>, vector<4x128xbf16>, vector<256x128xf32> -> vector<256x128xf32>
    %25 = arith.addf %19, %24 : vector<256x128xf32>
    %26 = vector.extract_strided_slice %0 {offsets = [0, 1, 1, 0], sizes = [1, 16, 16, 4], strides = [1, 1, 1, 1]} : vector<1x18x18x4xbf16> to vector<1x16x16x4xbf16>
    %27 = vector.shape_cast %26 : vector<1x16x16x4xbf16> to vector<256x4xbf16>
    %c4 = arith.constant 4 : index
    %c0_16 = arith.constant 0 : index
    %c0_17 = arith.constant 0 : index
    %28 = vector.load %arg2[%c4, %c0_16, %c0_17] : memref<9x4x128xbf16, #tpu.memory_space<vmem>>, vector<1x4x128xbf16>
    %29 = vector.shape_cast %28 : vector<1x4x128xbf16> to vector<4x128xbf16>
    %cst_18 = arith.constant dense<0.000000e+00> : vector<256x128xf32>
    %30 = tpu.matmul %27, %29, %cst_18 {dimension_numbers = #tpu.dot_dimension_numbers<[1], [0], [0], [1], [0, 0, 1, 1], [], []>} : vector<256x4xbf16>, vector<4x128xbf16>, vector<256x128xf32> -> vector<256x128xf32>
    %31 = arith.addf %25, %30 : vector<256x128xf32>
    %32 = vector.extract_strided_slice %0 {offsets = [0, 1, 2, 0], sizes = [1, 16, 16, 4], strides = [1, 1, 1, 1]} : vector<1x18x18x4xbf16> to vector<1x16x16x4xbf16>
    %33 = vector.shape_cast %32 : vector<1x16x16x4xbf16> to vector<256x4xbf16>
    %c5 = arith.constant 5 : index
    %c0_19 = arith.constant 0 : index
    %c0_20 = arith.constant 0 : index
    %34 = vector.load %arg2[%c5, %c0_19, %c0_20] : memref<9x4x128xbf16, #tpu.memory_space<vmem>>, vector<1x4x128xbf16>
    %35 = vector.shape_cast %34 : vector<1x4x128xbf16> to vector<4x128xbf16>
    %cst_21 = arith.constant dense<0.000000e+00> : vector<256x128xf32>
    %36 = tpu.matmul %33, %35, %cst_21 {dimension_numbers = #tpu.dot_dimension_numbers<[1], [0], [0], [1], [0, 0, 1, 1], [], []>} : vector<256x4xbf16>, vector<4x128xbf16>, vector<256x128xf32> -> vector<256x128xf32>
    %37 = arith.addf %31, %36 : vector<256x128xf32>
    %38 = vector.extract_strided_slice %0 {offsets = [0, 2, 0, 0], sizes = [1, 16, 16, 4], strides = [1, 1, 1, 1]} : vector<1x18x18x4xbf16> to vector<1x16x16x4xbf16>
    %39 = vector.shape_cast %38 : vector<1x16x16x4xbf16> to vector<256x4xbf16>
    %c6 = arith.constant 6 : index
    %c0_22 = arith.constant 0 : index
    %c0_23 = arith.constant 0 : index
    %40 = vector.load %arg2[%c6, %c0_22, %c0_23] : memref<9x4x128xbf16, #tpu.memory_space<vmem>>, vector<1x4x128xbf16>
    %41 = vector.shape_cast %40 : vector<1x4x128xbf16> to vector<4x128xbf16>
    %cst_24 = arith.constant dense<0.000000e+00> : vector<256x128xf32>
    %42 = tpu.matmul %39, %41, %cst_24 {dimension_numbers = #tpu.dot_dimension_numbers<[1], [0], [0], [1], [0, 0, 1, 1], [], []>} : vector<256x4xbf16>, vector<4x128xbf16>, vector<256x128xf32> -> vector<256x128xf32>
    %43 = arith.addf %37, %42 : vector<256x128xf32>
    %44 = vector.extract_strided_slice %0 {offsets = [0, 2, 1, 0], sizes = [1, 16, 16, 4], strides = [1, 1, 1, 1]} : vector<1x18x18x4xbf16> to vector<1x16x16x4xbf16>
    %45 = vector.shape_cast %44 : vector<1x16x16x4xbf16> to vector<256x4xbf16>
    %c7 = arith.constant 7 : index
    %c0_25 = arith.constant 0 : index
    %c0_26 = arith.constant 0 : index
    %46 = vector.load %arg2[%c7, %c0_25, %c0_26] : memref<9x4x128xbf16, #tpu.memory_space<vmem>>, vector<1x4x128xbf16>
    %47 = vector.shape_cast %46 : vector<1x4x128xbf16> to vector<4x128xbf16>
    %cst_27 = arith.constant dense<0.000000e+00> : vector<256x128xf32>
    %48 = tpu.matmul %45, %47, %cst_27 {dimension_numbers = #tpu.dot_dimension_numbers<[1], [0], [0], [1], [0, 0, 1, 1], [], []>} : vector<256x4xbf16>, vector<4x128xbf16>, vector<256x128xf32> -> vector<256x128xf32>
    %49 = arith.addf %43, %48 : vector<256x128xf32>
    %50 = vector.extract_strided_slice %0 {offsets = [0, 2, 2, 0], sizes = [1, 16, 16, 4], strides = [1, 1, 1, 1]} : vector<1x18x18x4xbf16> to vector<1x16x16x4xbf16>
    %51 = vector.shape_cast %50 : vector<1x16x16x4xbf16> to vector<256x4xbf16>
    %c8 = arith.constant 8 : index
    %c0_28 = arith.constant 0 : index
    %c0_29 = arith.constant 0 : index
    %52 = vector.load %arg2[%c8, %c0_28, %c0_29] : memref<9x4x128xbf16, #tpu.memory_space<vmem>>, vector<1x4x128xbf16>
    %53 = vector.shape_cast %52 : vector<1x4x128xbf16> to vector<4x128xbf16>
    %cst_30 = arith.constant dense<0.000000e+00> : vector<256x128xf32>
    %54 = tpu.matmul %51, %53, %cst_30 {dimension_numbers = #tpu.dot_dimension_numbers<[1], [0], [0], [1], [0, 0, 1, 1], [], []>} : vector<256x4xbf16>, vector<4x128xbf16>, vector<256x128xf32> -> vector<256x128xf32>
    %55 = arith.addf %49, %54 : vector<256x128xf32>
    %c0_31 = arith.constant 0 : index
    %c0_32 = arith.constant 0 : index
    %56 = vector.load %arg3[%c0_31, %c0_32] : memref<1x128xf32, #tpu.memory_space<vmem>>, vector<1x128xf32>
    %57 = vector.broadcast %56 : vector<1x128xf32> to vector<256x128xf32>
    %58 = arith.addf %55, %57 : vector<256x128xf32>
    %cst_33 = arith.constant 0.000000e+00 : f32
    %59 = vector.broadcast %cst_33 : f32 to vector<256x128xf32>
    %60 = arith.maximumf %58, %59 : vector<256x128xf32>
    %cst_34 = arith.constant dense<0.000000e+00> : vector<128xf32>
    %61 = vector.multi_reduction <add>, %60, %cst_34 [0] : vector<256x128xf32> to vector<128xf32>
    %62 = vector.shape_cast %61 : vector<128xf32> to vector<1x128xf32>
    %cst_35 = arith.constant 2.560000e+02 : f32
    %63 = vector.broadcast %cst_35 : f32 to vector<1x128xf32>
    %64 = arith.divf %62, %63 : vector<1x128xf32>
    %c0_36 = arith.constant 0 : index
    %c0_37 = arith.constant 0 : index
    %c0_38 = arith.constant 0 : index
    %65 = vector.load %arg4[%c0_36, %c0_37, %c0_38] : memref<1x1x128xf32, #tpu.memory_space<vmem>>, vector<1x1x128xf32>
    %66 = vector.shape_cast %65 : vector<1x1x128xf32> to vector<1x128xf32>
    %67 = vector.shape_cast %64 : vector<1x128xf32> to vector<1x1x128xf32>
    tpu.vector_store %arg4[%c0_36, %c0_37, %c0_38], %67 {strides = array<i32>} : memref<1x1x128xf32, #tpu.memory_space<vmem>>, vector<1x1x128xf32>,
    return
  }
  func.func @transform_0(%arg0: i32) -> (i32, i32, i32, i32) {
    %c0_i32 = arith.constant 0 : i32
    %c0_i32_0 = arith.constant 0 : i32
    %c0_i32_1 = arith.constant 0 : i32
    %c0_i32_2 = arith.constant 0 : i32
    return %arg0, %c0_i32, %c0_i32_0, %c0_i32_1 : i32, i32, i32, i32
  }
  func.func @transform_1(%arg0: i32) -> (i32, i32, i32) {
    %c0_i32 = arith.constant 0 : i32
    %c0_i32_0 = arith.constant 0 : i32
    %c0_i32_1 = arith.constant 0 : i32
    %c0_i32_2 = arith.constant 0 : i32
    return %c0_i32, %c0_i32_0, %c0_i32_1 : i32, i32, i32
  }
  func.func @transform_2(%arg0: i32) -> (i32, i32) {
    %c0_i32 = arith.constant 0 : i32
    %c0_i32_0 = arith.constant 0 : i32
    %c0_i32_1 = arith.constant 0 : i32
    return %c0_i32, %c0_i32_0 : i32, i32
  }
  func.func @transform_3(%arg0: i32) -> (i32, i32, i32) {
    %c0_i32 = arith.constant 0 : i32
    %c0_i32_0 = arith.constant 0 : i32
    %c0_i32_1 = arith.constant 0 : i32
    return %arg0, %c0_i32, %c0_i32_0 : i32, i32, i32
  }
}

</mosaic_0001>

<llo_original>
// kernel: tpu_custom_call.1
$region0: #{tpu_custom_call.1}
  #allocation0 [shape = 'u32[]', space=smem, size = 0x4, offset = 0x4, fixed_abs, tag = 'smem constant byte address 0x4 - core index']
  #allocation1 [shape = 'u32[144,128]{1,0:T(1,128)}', space=vmem, size = 0x12000, scoped, tag = 'internal scratch']
  %s0 = inlined_call_operand.vmem [shape: bf16[2,18,18,4], index: 0, kind: input, shape index: {}]
  %s1 = inlined_call_operand.vmem [shape: bf16[9,4,128], index: 1, kind: input, shape index: {}]
  %s2 = inlined_call_operand.vmem [shape: f32[1,128], index: 2, kind: input, shape index: {}]
  %s3 = inlined_call_operand.hbm [shape: f32[2,1,128], index: 3, kind: output, shape index: {}]
  %s4 = sld [smem:[#allocation0]]
  $region45: #{tpu_custom_call.1} parent=0
    _
  %s6 = ssub.s32 1, %s4
  %s7 = scalar_select 0, %s6, %s4
  $region1: #{tpu_custom_call.1} parent=0
    #allocation2 [shape = 'u8[1024]{0}', space=vmem, size = 0x400, scoped, tag = 'output window, operand 0']
    #allocation3 [shape = 's32[2]{0}', space=sflag, size = 0x8, scoped, tag = 'scoped memory for tpu_custom_call.1']
    %8 = vsyncpa [#allocation3], 0
    %s9 = scalar_lea.sflag [#allocation3], 1
    %10 = vsyncpa %s9, 0
    loop: start=0, step=1, limit=4
    $region2: #{tpu_custom_call.1} parent=1 // loop_pre_header
      _
    $region3: #{tpu_custom_call.1} parent=1 // loop_header
      %s12 = sphi 0, %s16
      %p13 = scmp.ge.s32.totalorder %s12, 4
      %s22 = sphi 0, %s24
      %s25 = sphi 0, %s22
      %s26 = sphi 0, %s25
      %s42 = sphi 0, %s26
      %s46 = sphi 0, %s46
      %s48 = sphi 0, %s46
      %s49 = sphi 0, %s48
      %s63 = sphi 0, %s49
      %s67 = sphi 0, %s67
      %s69 = sphi 0, %s67
      %s70 = sphi 0, %s69
      %s84 = sphi 0, %s70
      %s90 = sphi 0, %s92
      %s93 = sphi 0, %s90
      %s94 = sphi 0, %s93
      %s110 = sphi 0, %s94
    $region4: #{tpu_custom_call.1} parent=1 // loop_header_branch
      %15 = sbr.rel (%p13) target = $region8
    $region5: #{tpu_custom_call.1} parent=1 // loop_body
      %s17 = ssub.s32 %s12, 1
      %s18 = ssub.s32 %s12, 2
      %s19 = sadd.s32 %s12, 1
      %s20 = ssub.s32 %s12, %s19
      %p21 = scmp.eq.s32.totalorder %s20, 0
      %s23 = sadd.s32 %s22, 1
      %s24 = scalar_select %p21, %s22, %s23
      %p27 = pneg %p21
      %p28 = scmp.eq.s32.totalorder %s12, 1
      %p29 = por %p27, %p28
      %p30 = scmp.ne.s32.totalorder %s22, %s25
      %p31 = scmp.eq.s32.totalorder %s12, 0
      %p32 = por %p30, %p31
      %p33 = scmp.ne.s32.totalorder %s22, %s25
      %p34 = scmp.eq.s32.totalorder %s17, 1
      %p35 = por %p33, %p34
      %p36 = scmp.ne.s32.totalorder %s25, %s26
      %p37 = scmp.eq.s32.totalorder %s17, 0
      %p38 = por %p36, %p37
      %p39 = scmp.ne.s32.totalorder %s25, %s26
      %p40 = scmp.eq.s32.totalorder %s18, 1
      %p41 = por %p39, %p40
      %p43 = scmp.ne.s32.totalorder %s26, %s42
      %p44 = scmp.eq.s32.totalorder %s18, 0
      %p45 = por %p43, %p44
      %s47 = sadd.s32 %s46, 1
      %p50 = scmp.eq.s32.totalorder %s12, 1
      %p51 = scmp.ne.s32.totalorder %s46, %s48
      %p52 = scmp.eq.s32.totalorder %s12, 0
      %p53 = por %p51, %p52
      %p54 = scmp.ne.s32.totalorder %s46, %s48
      %p55 = scmp.eq.s32.totalorder %s17, 1
      %p56 = por %p54, %p55
      %p57 = scmp.ne.s32.totalorder %s48, %s49
      %p58 = scmp.eq.s32.totalorder %s17, 0
      %p59 = por %p57, %p58
      %p60 = scmp.ne.s32.totalorder %s48, %s49
      %p61 = scmp.eq.s32.totalorder %s18, 1
      %p62 = por %p60, %p61
      %p64 = scmp.ne.s32.totalorder %s49, %s63
      %p65 = scmp.eq.s32.totalorder %s18, 0
      %p66 = por %p64, %p65
      %s68 = sadd.s32 %s67, 1
      %p71 = scmp.eq.s32.totalorder %s12, 1
      %p72 = scmp.ne.s32.totalorder %s67, %s69
      %p73 = scmp.eq.s32.totalorder %s12, 0
      %p74 = por %p72, %p73
      %p75 = scmp.ne.s32.totalorder %s67, %s69
      %p76 = scmp.eq.s32.totalorder %s17, 1
      %p77 = por %p75, %p76
      %p78 = scmp.ne.s32.totalorder %s69, %s70
      %p79 = scmp.eq.s32.totalorder %s17, 0
      %p80 = por %p78, %p79
      %p81 = scmp.ne.s32.totalorder %s69, %s70
      %p82 = scmp.eq.s32.totalorder %s18, 1
      %p83 = por %p81, %p82
      %p85 = scmp.ne.s32.totalorder %s70, %s84
      %p86 = scmp.eq.s32.totalorder %s18, 0
      %p87 = por %p85, %p86
      %s88 = ssub.s32 %s12, %s19
      %p89 = scmp.eq.s32.totalorder %s88, 0
      %s91 = sadd.s32 %s90, 1
      %s92 = scalar_select %p89, %s90, %s91
      %p95 = pneg %p89
      %p96 = scmp.eq.s32.totalorder %s12, 1
      %p97 = por %p95, %p96
      %p98 = scmp.ne.s32.totalorder %s90, %s93
      %p99 = scmp.eq.s32.totalorder %s12, 0
      %p100 = por %p98, %p99
      %p101 = scmp.ne.s32.totalorder %s90, %s93
      %p102 = scmp.eq.s32.totalorder %s17, 1
      %p103 = por %p101, %p102
      %p104 = scmp.ne.s32.totalorder %s93, %s94
      %p105 = scmp.eq.s32.totalorder %s17, 0
      %p106 = por %p104, %p105
      %p107 = scmp.ne.s32.totalorder %s93, %s94
      %p108 = scmp.eq.s32.totalorder %s18, 1
      %p109 = por %p107, %p108
      %p111 = scmp.ne.s32.totalorder %s94, %s110
      %p112 = scmp.eq.s32.totalorder %s18, 0
      %p113 = por %p111, %p112
      %p114 = scmp.le.s32.totalorder 1, %s12
      %p115 = scmp.lt.s32.totalorder %s12, 3
      %p116 = pnand %p114, %p115
      %p117 = pneg %p116
      // Predicated region
      $region9: #{tpu_custom_call.1} parent=5 // pred_check
        _
      $region10: #{tpu_custom_call.1} parent=5 // pred_check_branch
        %119 = sbr.rel (%p116) target = $region12
      $region11: #{tpu_custom_call.1} parent=5 // pred_region
        %s120 = ssub.s32 %s12, 1
        // Predicated region
        $region13: #{tpu_custom_call.1} parent=11 // pred_check
          %p121 = pneg %p59
        $region14: #{tpu_custom_call.1} parent=11 // pred_check_branch
          %123 = sbr.rel (%p121) target = $region16
        $region15: #{tpu_custom_call.1} parent=11 // pred_region
          _
        $region16: #{tpu_custom_call.1} parent=11 // pred_fallthru
          _
        // Predicated region
        $region17: #{tpu_custom_call.1} parent=11 // pred_check
          %p124 = pneg %p80
        $region18: #{tpu_custom_call.1} parent=11 // pred_check_branch
          %126 = sbr.rel (%p124) target = $region20
        $region19: #{tpu_custom_call.1} parent=11 // pred_region
          _
        $region20: #{tpu_custom_call.1} parent=11 // pred_fallthru
          _
      $region12: #{tpu_custom_call.1} parent=5 // pred_fallthru
        _
      %p127 = scmp.lt.s32.totalorder %s12, 2
      // Predicated region
      $region21: #{tpu_custom_call.1} parent=5 // pred_check
        %p128 = pneg %p127
      $region22: #{tpu_custom_call.1} parent=5 // pred_check_branch
        %130 = sbr.rel (%p128) target = $region24
      $region23: #{tpu_custom_call.1} parent=5 // pred_region
        // Predicated region
        $region25: #{tpu_custom_call.1} parent=23 // pred_check
          %p131 = pneg %p32
        $region26: #{tpu_custom_call.1} parent=23 // pred_check_branch
          %133 = sbr.rel (%p131) target = $region28
        $region27: #{tpu_custom_call.1} parent=23 // pred_region
          %p134 = scmp.lt.s32.totalorder %s12, 1
          %s135 = scalar_select %p134, %s12, 1
          %s136 = smul.addr %s135, 54
          %s137 = smul.addr %s136, 4
          %s138 = scalar_lea.vmem %s0, %s137
        $region28: #{tpu_custom_call.1} parent=23 // pred_fallthru
          _
      $region24: #{tpu_custom_call.1} parent=5 // pred_fallthru
        _
      %p139 = scmp.le.s32.totalorder 1, %s12
      %p140 = scmp.lt.s32.totalorder %s12, 3
      %p141 = pnand %p139, %p140
      %p142 = pneg %p141
      // Predicated region
      $region29: #{tpu_custom_call.1} parent=5 // pred_check
        _
      $region30: #{tpu_custom_call.1} parent=5 // pred_check_branch
        %144 = sbr.rel (%p141) target = $region32
      $region31: #{tpu_custom_call.1} parent=5 // pred_region
        %s145 = ssub.s32 %s12, 1
        %p146 = scmp.lt.s32.totalorder %s17, 1
        %s147 = scalar_select %p146, %s17, 1
        %s148 = smul.addr %s147, 54
        %s149 = smul.addr %s148, 4
        %s150 = scalar_lea.vmem %s0, %s149
        %p151 = pneg %p38
        %p152 = pneg %p35
        %p153 = pneg %p59
        %p154 = pneg %p56
        %p155 = pneg %p80
        %p156 = pneg %p77
        %p157 = pneg %p106
        %p158 = pneg %p103
        %s159 = sand.u32 %s93, 1
        %s160 = scalar_lea.sflag [#allocation3], %s159
        %s161 = sand.u32 %s93, 1
        %s162 = scalar_lea.vmem [#allocation2], %s161
        %p163 = scmp.lt.s32.totalorder %s17, 1
        %s164 = scalar_select %p163, %s17, 1
        %s165 = smul.addr %s164, 54
        %s166 = smul.addr %s165, 4
        %s167 = scalar_lea.vmem %s0, %s166
        %v169 = vld [vmem:[%s167] sm:$0xf]
        %v170 = vld [vmem:[%s167 + $0x4] sm:$0xf]
        %v171 = vld [vmem:[%s167 + $0x8] sm:$0x1]
        %v172 = vld [vmem:[%s167 + $0xc] sm:$0xf]
        %v173 = vld [vmem:[%s167 + $0x10] sm:$0xf]
        %v174 = vld [vmem:[%s167 + $0x14] sm:$0x1]
        %v175 = vld [vmem:[%s167 + $0x18] sm:$0xf]
        %v176 = vld [vmem:[%s167 + $0x1c] sm:$0xf]
        %v177 = vld [vmem:[%s167 + $0x20] sm:$0x1]
        %v178 = vld [vmem:[%s167 + $0x24] sm:$0xf]
        %v179 = vld [vmem:[%s167 + $0x28] sm:$0xf]
        %v180 = vld [vmem:[%s167 + $0x2c] sm:$0x1]
        %v181 = vld [vmem:[%s167 + $0x30] sm:$0xf]
        %v182 = vld [vmem:[%s167 + $0x34] sm:$0xf]
        %v183 = vld [vmem:[%s167 + $0x38] sm:$0x1]
        %v184 = vld [vmem:[%s167 + $0x3c] sm:$0xf]
        %v185 = vld [vmem:[%s167 + $0x40] sm:$0xf]
        %v186 = vld [vmem:[%s167 + $0x44] sm:$0x1]
        %v187 = vld [vmem:[%s167 + $0x48] sm:$0xf]
        %v188 = vld [vmem:[%s167 + $0x4c] sm:$0xf]
        %v189 = vld [vmem:[%s167 + $0x50] sm:$0x1]
        %v190 = vld [vmem:[%s167 + $0x54] sm:$0xf]
        %v191 = vld [vmem:[%s167 + $0x58] sm:$0xf]
        %v192 = vld [vmem:[%s167 + $0x5c] sm:$0x1]
        %v193 = vld [vmem:[%s167 + $0x60] sm:$0xf]
        %v194 = vld [vmem:[%s167 + $0x64] sm:$0xf]
        %v195 = vld [vmem:[%s167 + $0x68] sm:$0x1]
        %v196 = vld [vmem:[%s167 + $0x6c] sm:$0xf]
        %v197 = vld [vmem:[%s167 + $0x70] sm:$0xf]
        %v198 = vld [vmem:[%s167 + $0x74] sm:$0x1]
        %v199 = vld [vmem:[%s167 + $0x78] sm:$0xf]
        %v200 = vld [vmem:[%s167 + $0x7c] sm:$0xf]
        %v201 = vld [vmem:[%s167 + $0x80] sm:$0x1]
        %v202 = vld [vmem:[%s167 + $0x84] sm:$0xf]
        %v203 = vld [vmem:[%s167 + $0x88] sm:$0xf]
        %v204 = vld [vmem:[%s167 + $0x8c] sm:$0x1]
        %v205 = vld [vmem:[%s167 + $0x90] sm:$0xf]
        %v206 = vld [vmem:[%s167 + $0x94] sm:$0xf]
        %v207 = vld [vmem:[%s167 + $0x98] sm:$0x1]
        %v208 = vld [vmem:[%s167 + $0x9c] sm:$0xf]
        %v209 = vld [vmem:[%s167 + $0xa0] sm:$0xf]
        %v210 = vld [vmem:[%s167 + $0xa4] sm:$0x1]
        %v211 = vld [vmem:[%s167 + $0xa8] sm:$0xf]
        %v212 = vld [vmem:[%s167 + $0xac] sm:$0xf]
        %v213 = vld [vmem:[%s167 + $0xb0] sm:$0x1]
        %v214 = vld [vmem:[%s167 + $0xb4] sm:$0xf]
        %v215 = vld [vmem:[%s167 + $0xb8] sm:$0xf]
        %v216 = vld [vmem:[%s167 + $0xbc] sm:$0x1]
        %v217 = vld [vmem:[%s167 + $0xc0] sm:$0xf]
        %v218 = vld [vmem:[%s167 + $0xc4] sm:$0xf]
        %v219 = vld [vmem:[%s167 + $0xc8] sm:$0x1]
        %v220 = vld [vmem:[%s167 + $0xcc] sm:$0xf]
        %v221 = vld [vmem:[%s167 + $0xd0] sm:$0xf]
        %v222 = vld [vmem:[%s167 + $0xd4] sm:$0x1]
        %v223 = vld [vmem:[%s1] sm:$0x3]
        %vm224 = vsmask.f32 3328
        %vm225 = vsmask.f32 7440
        %vm226 = vmor %vm224, %vm225
        %v228 = vshrl.u32 %v169, 16
        %v230 = vrot.slane %v228, 4
        %v231 = vshll.u32 %v169, 16
        %v233 = vrot.slane %v231, 5
        %v234 = vor.u32 %v230, %v233
        %v235 = vrot.slane %v234, 4
        %v237 = vshll.u32 %v170, 16
        %v239 = vrot.slane %v237, 5
        %v240 = vsel %vm226, %v235, %v239
        %v241 = vshrl.u32 %v170, 16
        %v243 = vrot.slane %v241, 4
        %v244 = vor.u32 %v243, %v239
        %v245 = vrot.slane %v244, 4
        %v247 = vshll.u32 %v171, 16
        %v249 = vrot.slane %v247, 5
        %v250 = vsel %vm226, %v245, %v249
        %v252 = vshrl.u32 %v172, 16
        %v254 = vrot.slane %v252, 4
        %v255 = vshll.u32 %v172, 16
        %v257 = vrot.slane %v255, 5
        %v258 = vor.u32 %v254, %v257
        %v259 = vrot.slane %v258, 4
        %v261 = vshll.u32 %v173, 16
        %v263 = vrot.slane %v261, 5
        %v264 = vsel %vm226, %v259, %v263
        %v265 = vshrl.u32 %v173, 16
        %v267 = vrot.slane %v265, 4
        %v268 = vor.u32 %v267, %v263
        %v269 = vrot.slane %v268, 4
        %v271 = vshll.u32 %v174, 16
        %v273 = vrot.slane %v271, 5
        %v274 = vsel %vm226, %v269, %v273
        %v276 = vshrl.u32 %v175, 16
        %v278 = vrot.slane %v276, 4
        %v279 = vshll.u32 %v175, 16
        %v281 = vrot.slane %v279, 5
        %v282 = vor.u32 %v278, %v281
        %v283 = vrot.slane %v282, 4
        %v285 = vshll.u32 %v176, 16
        %v287 = vrot.slane %v285, 5
        %v288 = vsel %vm226, %v283, %v287
        %v289 = vshrl.u32 %v176, 16
        %v291 = vrot.slane %v289, 4
        %v292 = vor.u32 %v291, %v287
        %v293 = vrot.slane %v292, 4
        %v295 = vshll.u32 %v177, 16
        %v297 = vrot.slane %v295, 5
        %v298 = vsel %vm226, %v293, %v297
        %v300 = vshrl.u32 %v178, 16
        %v302 = vrot.slane %v300, 4
        %v303 = vshll.u32 %v178, 16
        %v305 = vrot.slane %v303, 5
        %v306 = vor.u32 %v302, %v305
        %v307 = vrot.slane %v306, 4
        %v309 = vshll.u32 %v179, 16
        %v311 = vrot.slane %v309, 5
        %v312 = vsel %vm226, %v307, %v311
        %v313 = vshrl.u32 %v179, 16
        %v315 = vrot.slane %v313, 4
        %v316 = vor.u32 %v315, %v311
        %v317 = vrot.slane %v316, 4
        %v319 = vshll.u32 %v180, 16
        %v321 = vrot.slane %v319, 5
        %v322 = vsel %vm226, %v317, %v321
        %v324 = vshrl.u32 %v181, 16
        %v326 = vrot.slane %v324, 4
        %v327 = vshll.u32 %v181, 16
        %v329 = vrot.slane %v327, 5
        %v330 = vor.u32 %v326, %v329
        %v331 = vrot.slane %v330, 4
        %v333 = vshll.u32 %v182, 16
        %v335 = vrot.slane %v333, 5
        %v336 = vsel %vm226, %v331, %v335
        %v337 = vshrl.u32 %v182, 16
        %v339 = vrot.slane %v337, 4
        %v340 = vor.u32 %v339, %v335
        %v341 = vrot.slane %v340, 4
        %v343 = vshll.u32 %v183, 16
        %v345 = vrot.slane %v343, 5
        %v346 = vsel %vm226, %v341, %v345
        %v348 = vshrl.u32 %v184, 16
        %v350 = vrot.slane %v348, 4
        %v351 = vshll.u32 %v184, 16
        %v353 = vrot.slane %v351, 5
        %v354 = vor.u32 %v350, %v353
        %v355 = vrot.slane %v354, 4
        %v357 = vshll.u32 %v185, 16
        %v359 = vrot.slane %v357, 5
        %v360 = vsel %vm226, %v355, %v359
        %v361 = vshrl.u32 %v185, 16
        %v363 = vrot.slane %v361, 4
        %v364 = vor.u32 %v363, %v359
        %v365 = vrot.slane %v364, 4
        %v367 = vshll.u32 %v186, 16
        %v369 = vrot.slane %v367, 5
        %v370 = vsel %vm226, %v365, %v369
        %v372 = vshrl.u32 %v187, 16
        %v374 = vrot.slane %v372, 4
        %v375 = vshll.u32 %v187, 16
        %v377 = vrot.slane %v375, 5
        %v378 = vor.u32 %v374, %v377
        %v379 = vrot.slane %v378, 4
        %v381 = vshll.u32 %v188, 16
        %v383 = vrot.slane %v381, 5
        %v384 = vsel %vm226, %v379, %v383
        %v385 = vshrl.u32 %v188, 16
        %v387 = vrot.slane %v385, 4
        %v388 = vor.u32 %v387, %v383
        %v389 = vrot.slane %v388, 4
        %v391 = vshll.u32 %v189, 16
        %v393 = vrot.slane %v391, 5
        %v394 = vsel %vm226, %v389, %v393
        %v396 = vshrl.u32 %v190, 16
        %v398 = vrot.slane %v396, 4
        %v399 = vshll.u32 %v190, 16
        %v401 = vrot.slane %v399, 5
        %v402 = vor.u32 %v398, %v401
        %v403 = vrot.slane %v402, 4
        %v405 = vshll.u32 %v191, 16
        %v407 = vrot.slane %v405, 5
        %v408 = vsel %vm226, %v403, %v407
        %v409 = vshrl.u32 %v191, 16
        %v411 = vrot.slane %v409, 4
        %v412 = vor.u32 %v411, %v407
        %v413 = vrot.slane %v412, 4
        %v415 = vshll.u32 %v192, 16
        %v417 = vrot.slane %v415, 5
        %v418 = vsel %vm226, %v413, %v417
        %v420 = vshrl.u32 %v193, 16
        %v422 = vrot.slane %v420, 4
        %v423 = vshll.u32 %v193, 16
        %v425 = vrot.slane %v423, 5
        %v426 = vor.u32 %v422, %v425
        %v427 = vrot.slane %v426, 4
        %v429 = vshll.u32 %v194, 16
        %v431 = vrot.slane %v429, 5
        %v432 = vsel %vm226, %v427, %v431
        %v433 = vshrl.u32 %v194, 16
        %v435 = vrot.slane %v433, 4
        %v436 = vor.u32 %v435, %v431
        %v437 = vrot.slane %v436, 4
        %v439 = vshll.u32 %v195, 16
        %v441 = vrot.slane %v439, 5
        %v442 = vsel %vm226, %v437, %v441
        %v444 = vshrl.u32 %v196, 16
        %v446 = vrot.slane %v444, 4
        %v447 = vshll.u32 %v196, 16
        %v449 = vrot.slane %v447, 5
        %v450 = vor.u32 %v446, %v449
        %v451 = vrot.slane %v450, 4
        %v453 = vshll.u32 %v197, 16
        %v455 = vrot.slane %v453, 5
        %v456 = vsel %vm226, %v451, %v455
        %v457 = vshrl.u32 %v197, 16
        %v459 = vrot.slane %v457, 4
        %v460 = vor.u32 %v459, %v455
        %v461 = vrot.slane %v460, 4
        %v463 = vshll.u32 %v198, 16
        %v465 = vrot.slane %v463, 5
        %v466 = vsel %vm226, %v461, %v465
        %v468 = vshrl.u32 %v199, 16
        %v470 = vrot.slane %v468, 4
        %v471 = vshll.u32 %v199, 16
        %v473 = vrot.slane %v471, 5
        %v474 = vor.u32 %v470, %v473
        %v475 = vrot.slane %v474, 4
        %v477 = vshll.u32 %v200, 16
        %v479 = vrot.slane %v477, 5
        %v480 = vsel %vm226, %v475, %v479
        %v481 = vshrl.u32 %v200, 16
        %v483 = vrot.slane %v481, 4
        %v484 = vor.u32 %v483, %v479
        %v485 = vrot.slane %v484, 4
        %v487 = vshll.u32 %v201, 16
        %v489 = vrot.slane %v487, 5
        %v490 = vsel %vm226, %v485, %v489
        %v492 = vshrl.u32 %v202, 16
        %v494 = vrot.slane %v492, 4
        %v495 = vshll.u32 %v202, 16
        %v497 = vrot.slane %v495, 5
        %v498 = vor.u32 %v494, %v497
        %v499 = vrot.slane %v498, 4
        %v501 = vshll.u32 %v203, 16
        %v503 = vrot.slane %v501, 5
        %v504 = vsel %vm226, %v499, %v503
        %v505 = vshrl.u32 %v203, 16
        %v507 = vrot.slane %v505, 4
        %v508 = vor.u32 %v507, %v503
        %v509 = vrot.slane %v508, 4
        %v511 = vshll.u32 %v204, 16
        %v513 = vrot.slane %v511, 5
        %v514 = vsel %vm226, %v509, %v513
        %v516 = vshrl.u32 %v205, 16
        %v518 = vrot.slane %v516, 4
        %v519 = vshll.u32 %v205, 16
        %v521 = vrot.slane %v519, 5
        %v522 = vor.u32 %v518, %v521
        %v523 = vrot.slane %v522, 4
        %v525 = vshll.u32 %v206, 16
        %v527 = vrot.slane %v525, 5
        %v528 = vsel %vm226, %v523, %v527
        %v529 = vshrl.u32 %v206, 16
        %v531 = vrot.slane %v529, 4
        %v532 = vor.u32 %v531, %v527
        %v533 = vrot.slane %v532, 4
        %v535 = vshll.u32 %v207, 16
        %v537 = vrot.slane %v535, 5
        %v538 = vsel %vm226, %v533, %v537
        %v540 = vshrl.u32 %v208, 16
        %v542 = vrot.slane %v540, 4
        %v543 = vshll.u32 %v208, 16
        %v545 = vrot.slane %v543, 5
        %v546 = vor.u32 %v542, %v545
        %v547 = vrot.slane %v546, 4
        %v549 = vshll.u32 %v209, 16
        %v551 = vrot.slane %v549, 5
        %v552 = vsel %vm226, %v547, %v551
        %v553 = vshrl.u32 %v209, 16
        %v555 = vrot.slane %v553, 4
        %v556 = vor.u32 %v555, %v551
        %v557 = vrot.slane %v556, 4
        %v559 = vshll.u32 %v210, 16
        %v561 = vrot.slane %v559, 5
        %v562 = vsel %vm226, %v557, %v561
        %v564 = vshrl.u32 %v211, 16
        %v566 = vrot.slane %v564, 4
        %v567 = vshll.u32 %v211, 16
        %v569 = vrot.slane %v567, 5
        %v570 = vor.u32 %v566, %v569
        %v571 = vrot.slane %v570, 4
        %v573 = vshll.u32 %v212, 16
        %v575 = vrot.slane %v573, 5
        %v576 = vsel %vm226, %v571, %v575
        %v577 = vshrl.u32 %v212, 16
        %v579 = vrot.slane %v577, 4
        %v580 = vor.u32 %v579, %v575
        %v581 = vrot.slane %v580, 4
        %v583 = vshll.u32 %v213, 16
        %v585 = vrot.slane %v583, 5
        %v586 = vsel %vm226, %v581, %v585
        %v588 = vshrl.u32 %v214, 16
        %v590 = vrot.slane %v588, 4
        %v591 = vshll.u32 %v214, 16
        %v593 = vrot.slane %v591, 5
        %v594 = vor.u32 %v590, %v593
        %v595 = vrot.slane %v594, 4
        %v597 = vshll.u32 %v215, 16
        %v599 = vrot.slane %v597, 5
        %v600 = vsel %vm226, %v595, %v599
        %v601 = vshrl.u32 %v215, 16
        %v603 = vrot.slane %v601, 4
        %v604 = vor.u32 %v603, %v599
        %v605 = vrot.slane %v604, 4
        %v607 = vshll.u32 %v216, 16
        %v609 = vrot.slane %v607, 5
        %v610 = vsel %vm226, %v605, %v609
        %s611 = scalar_lea.vmem %s1, 2
        %v612 = vld [vmem:[%s611] sm:$0x3]
        %v613 = vunpack.c.l.b16 %v240
        %v614 = vunpack.c.l.b16 %v250
        %v615 = vunpack.c.l.b16 %v264
        %v616 = vunpack.c.l.b16 %v274
        %v617 = vunpack.c.l.b16 %v288
        %v618 = vunpack.c.l.b16 %v298
        %v619 = vunpack.c.l.b16 %v312
        %v620 = vunpack.c.l.b16 %v322
        %v621 = vunpack.c.l.b16 %v336
        %v622 = vunpack.c.l.b16 %v346
        %v623 = vunpack.c.l.b16 %v360
        %v624 = vunpack.c.l.b16 %v370
        %v625 = vunpack.c.l.b16 %v384
        %v626 = vunpack.c.l.b16 %v394
        %v627 = vunpack.c.l.b16 %v408
        %v628 = vunpack.c.l.b16 %v418
        %v629 = vunpack.c.l.b16 %v432
        %v630 = vunpack.c.l.b16 %v442
        %v631 = vunpack.c.l.b16 %v456
        %v632 = vunpack.c.l.b16 %v466
        %v633 = vunpack.c.l.b16 %v480
        %v634 = vunpack.c.l.b16 %v490
        %v635 = vunpack.c.l.b16 %v504
        %v636 = vunpack.c.l.b16 %v514
        %v637 = vunpack.c.l.b16 %v528
        %v638 = vunpack.c.l.b16 %v538
        %v639 = vunpack.c.l.b16 %v552
        %v640 = vunpack.c.l.b16 %v562
        %v641 = vunpack.c.l.b16 %v576
        %v642 = vunpack.c.l.b16 %v586
        %v643 = vunpack.c.l.b16 %v600
        %v644 = vunpack.c.l.b16 %v610
        %v645 = vpack.c.b16 %v614, %v613
        %v646 = vpack.c.b16 %v616, %v615
        %v647 = vpack.c.b16 %v618, %v617
        %v648 = vpack.c.b16 %v620, %v619
        %v649 = vpack.c.b16 %v622, %v621
        %v650 = vpack.c.b16 %v624, %v623
        %v651 = vpack.c.b16 %v626, %v625
        %v652 = vpack.c.b16 %v628, %v627
        %v653 = vpack.c.b16 %v630, %v629
        %v654 = vpack.c.b16 %v632, %v631
        %v655 = vpack.c.b16 %v634, %v633
        %v656 = vpack.c.b16 %v636, %v635
        %v657 = vpack.c.b16 %v638, %v637
        %v658 = vpack.c.b16 %v640, %v639
        %v659 = vpack.c.b16 %v642, %v641
        %v660 = vpack.c.b16 %v644, %v643
        %vm661 = vcmask 31744
        %v663 = vsel %vm661, %v645, 0
        %v666 = vsel %vm661, %v646, 0
        %v669 = vsel %vm661, %v647, 0
        %v672 = vsel %vm661, %v648, 0
        %v675 = vsel %vm661, %v649, 0
        %v678 = vsel %vm661, %v650, 0
        %v681 = vsel %vm661, %v651, 0
        %v684 = vsel %vm661, %v652, 0
        %v687 = vsel %vm661, %v653, 0
        %v690 = vsel %vm661, %v654, 0
        %v693 = vsel %vm661, %v655, 0
        %v696 = vsel %vm661, %v656, 0
        %v699 = vsel %vm661, %v657, 0
        %v702 = vsel %vm661, %v658, 0
        %v705 = vsel %vm661, %v659, 0
        %v708 = vsel %vm661, %v660, 0
        %vm710 = vcmask 1041408
        %v712 = vsel %vm710, %v612, 0
        %714 = vmatprep.subr.bf16.mxu0 0
        %715 = vmatpush1.bf16.msra.mxu0 %v712
        %716 = vmatprep.subr.bf16.mxu0 0
        %717 = vmatpush1.bf16.msra.mxu0 0
        %718 = vmatprep.subr.bf16.mxu0 0
        %719 = vmatpush1.bf16.msra.mxu0 0
        %720 = vmatprep.subr.bf16.mxu0 0
        %721 = vmatpush1.bf16.msra.mxu0 0
        %722 = vmatprep.subr.bf16.mxu0 0
        %723 = vmatpush1.bf16.msra.mxu0 0
        %724 = vmatprep.subr.bf16.mxu0 0
        %725 = vmatpush1.bf16.msra.mxu0 0
        %726 = vmatprep.subr.bf16.mxu0 0
        %727 = vmatpush1.bf16.msra.mxu0 0
        %728 = vmatprep.subr.bf16.mxu0 0
        %729 = vmatpush1.bf16.msra.mxu0 0
        %730 = vmatprep.subr.bf16.mxu0 0
        %731 = vmatpush1.bf16.msra.mxu0 0
        %732 = vmatprep.subr.bf16.mxu0 0
        %733 = vmatpush1.bf16.msra.mxu0 0
        %734 = vmatprep.subr.bf16.mxu0 0
        %735 = vmatpush1.bf16.msra.mxu0 0
        %736 = vmatprep.subr.bf16.mxu0 0
        %737 = vmatpush1.bf16.msra.mxu0 0
        %738 = vmatprep.subr.bf16.mxu0 0
        %739 = vmatpush1.bf16.msra.mxu0 0
        %740 = vmatprep.subr.bf16.mxu0 0
        %741 = vmatpush1.bf16.msra.mxu0 0
        %742 = vmatprep.subr.bf16.mxu0 0
        %743 = vmatpush1.bf16.msra.mxu0 0
        %744 = vmatprep.subr.bf16.mxu0 0
        %745 = vmatpush1.bf16.msra.mxu0 0
        %746 = vmatprep.mubr.bf16.mxu0 0
        %747 = vmatmul.mubr.bf16.gmra.mrb[0].mxu0 %v663
        %v748 = vpop.f32.mrb[0].mxu0
        %v749 = vadd.f32 0.0, %v748
        %v750 = vpop.f32.mrb[0].mxu0
        %v751 = vpop.f32.mrb[0].mxu0
        %v752 = vadd.f32 0.0, %v751
        %v753 = vpop.f32.mrb[0].mxu0
        %754 = vmatprep.mubr.bf16.mxu0 0
        %755 = vmatmul.mubr.bf16.gmra.mrb[0].mxu0 %v666
        %v756 = vpop.f32.mrb[0].mxu0
        %v757 = vadd.f32 0.0, %v756
        %v758 = vpop.f32.mrb[0].mxu0
        %v759 = vpop.f32.mrb[0].mxu0
        %v760 = vadd.f32 0.0, %v759
        %v761 = vpop.f32.mrb[0].mxu0
        %762 = vmatprep.mubr.bf16.mxu0 0
        %763 = vmatmul.mubr.bf16.gmra.mrb[0].mxu0 %v669
        %v764 = vpop.f32.mrb[0].mxu0
        %v765 = vadd.f32 0.0, %v764
        %v766 = vpop.f32.mrb[0].mxu0
        %v767 = vpop.f32.mrb[0].mxu0
        %v768 = vadd.f32 0.0, %v767
        %v769 = vpop.f32.mrb[0].mxu0
        %770 = vmatprep.mubr.bf16.mxu0 0
        %771 = vmatmul.mubr.bf16.gmra.mrb[0].mxu0 %v672
        %v772 = vpop.f32.mrb[0].mxu0
        %v773 = vadd.f32 0.0, %v772
        %v774 = vpop.f32.mrb[0].mxu0
        %v775 = vpop.f32.mrb[0].mxu0
        %v776 = vadd.f32 0.0, %v775
        %v777 = vpop.f32.mrb[0].mxu0
        %778 = vmatprep.mubr.bf16.mxu0 0
        %779 = vmatmul.mubr.bf16.gmra.mrb[0].mxu0 %v675
        %v780 = vpop.f32.mrb[0].mxu0
        %v781 = vadd.f32 0.0, %v780
        %v782 = vpop.f32.mrb[0].mxu0
        %v783 = vpop.f32.mrb[0].mxu0
        %v784 = vadd.f32 0.0, %v783
        %v785 = vpop.f32.mrb[0].mxu0
        %786 = vmatprep.mubr.bf16.mxu0 0
        %787 = vmatmul.mubr.bf16.gmra.mrb[0].mxu0 %v678
        %v788 = vpop.f32.mrb[0].mxu0
        %v789 = vadd.f32 0.0, %v788
        %v790 = vpop.f32.mrb[0].mxu0
        %v791 = vpop.f32.mrb[0].mxu0
        %v792 = vadd.f32 0.0, %v791
        %v793 = vpop.f32.mrb[0].mxu0
        %794 = vmatprep.mubr.bf16.mxu0 0
        %795 = vmatmul.mubr.bf16.gmra.mrb[0].mxu0 %v681
        %v796 = vpop.f32.mrb[0].mxu0
        %v797 = vadd.f32 0.0, %v796
        %v798 = vpop.f32.mrb[0].mxu0
        %v799 = vpop.f32.mrb[0].mxu0
        %v800 = vadd.f32 0.0, %v799
        %v801 = vpop.f32.mrb[0].mxu0
        %802 = vmatprep.mubr.bf16.mxu0 0
        %803 = vmatmul.mubr.bf16.gmra.mrb[0].mxu0 %v684
        %v804 = vpop.f32.mrb[0].mxu0
        %v805 = vadd.f32 0.0, %v804
        %v806 = vpop.f32.mrb[0].mxu0
        %v807 = vpop.f32.mrb[0].mxu0
        %v808 = vadd.f32 0.0, %v807
        %v809 = vpop.f32.mrb[0].mxu0
        %810 = vmatprep.mubr.bf16.mxu0 0
        %811 = vmatmul.mubr.bf16.gmra.mrb[0].mxu0 %v687
        %v812 = vpop.f32.mrb[0].mxu0
        %v813 = vadd.f32 0.0, %v812
        %v814 = vpop.f32.mrb[0].mxu0
        %v815 = vpop.f32.mrb[0].mxu0
        %v816 = vadd.f32 0.0, %v815
        %v817 = vpop.f32.mrb[0].mxu0
        %818 = vmatprep.mubr.bf16.mxu0 0
        %819 = vmatmul.mubr.bf16.gmra.mrb[0].mxu0 %v690
        %v820 = vpop.f32.mrb[0].mxu0
        %v821 = vadd.f32 0.0, %v820
        %v822 = vpop.f32.mrb[0].mxu0
        %v823 = vpop.f32.mrb[0].mxu0
        %v824 = vadd.f32 0.0, %v823
        %v825 = vpop.f32.mrb[0].mxu0
        %826 = vmatprep.mubr.bf16.mxu0 0
        %827 = vmatmul.mubr.bf16.gmra.mrb[0].mxu0 %v693
        %v828 = vpop.f32.mrb[0].mxu0
        %v829 = vadd.f32 0.0, %v828
        %v830 = vpop.f32.mrb[0].mxu0
        %v831 = vpop.f32.mrb[0].mxu0
        %v832 = vadd.f32 0.0, %v831
        %v833 = vpop.f32.mrb[0].mxu0
        %834 = vmatprep.mubr.bf16.mxu0 0
        %835 = vmatmul.mubr.bf16.gmra.mrb[0].mxu0 %v696
        %v836 = vpop.f32.mrb[0].mxu0
        %v837 = vadd.f32 0.0, %v836
        %v838 = vpop.f32.mrb[0].mxu0
        %v839 = vpop.f32.mrb[0].mxu0
        %v840 = vadd.f32 0.0, %v839
        %v841 = vpop.f32.mrb[0].mxu0
        %842 = vmatprep.mubr.bf16.mxu0 0
        %843 = vmatmul.mubr.bf16.gmra.mrb[0].mxu0 %v699
        %v844 = vpop.f32.mrb[0].mxu0
        %v845 = vadd.f32 0.0, %v844
        %v846 = vpop.f32.mrb[0].mxu0
        %v847 = vpop.f32.mrb[0].mxu0
        %v848 = vadd.f32 0.0, %v847
        %v849 = vpop.f32.mrb[0].mxu0
        %850 = vmatprep.mubr.bf16.mxu0 0
        %851 = vmatmul.mubr.bf16.gmra.mrb[0].mxu0 %v702
        %v852 = vpop.f32.mrb[0].mxu0
        %v853 = vadd.f32 0.0, %v852
        %v854 = vpop.f32.mrb[0].mxu0
        %v855 = vpop.f32.mrb[0].mxu0
        %v856 = vadd.f32 0.0, %v855
        %v857 = vpop.f32.mrb[0].mxu0
        %858 = vmatprep.mubr.bf16.mxu0 0
        %859 = vmatmul.mubr.bf16.gmra.mrb[0].mxu0 %v705
        %v860 = vpop.f32.mrb[0].mxu0
        %v861 = vadd.f32 0.0, %v860
        %v862 = vpop.f32.mrb[0].mxu0
        %v863 = vpop.f32.mrb[0].mxu0
        %v864 = vadd.f32 0.0, %v863
        %v865 = vpop.f32.mrb[0].mxu0
        %866 = vmatprep.mubr.bf16.mxu0 0
        %867 = vmatmul.mubr.bf16.gmra.mrb[0].mxu0 %v708
        %v868 = vpop.f32.mrb[0].mxu0
        %v869 = vadd.f32 0.0, %v868
        %v870 = vpop.f32.mrb[0].mxu0
        %v871 = vpop.f32.mrb[0].mxu0
        %v872 = vadd.f32 0.0, %v871
        %v873 = vpop.f32.mrb[0].mxu0
        %874 = vdwg.mxu0
        %v907 = vunpack.c.l.b16 %v169
        %v908 = vunpack.c.l.b16 %v170
        %v909 = vunpack.c.l.b16 %v172
        %v910 = vunpack.c.l.b16 %v173
        %v911 = vunpack.c.l.b16 %v175
        %v912 = vunpack.c.l.b16 %v176
        %v913 = vunpack.c.l.b16 %v178
        %v914 = vunpack.c.l.b16 %v179
        %v915 = vunpack.c.l.b16 %v181
        %v916 = vunpack.c.l.b16 %v182
        %v917 = vunpack.c.l.b16 %v184
        %v918 = vunpack.c.l.b16 %v185
        %v919 = vunpack.c.l.b16 %v187
        %v920 = vunpack.c.l.b16 %v188
        %v921 = vunpack.c.l.b16 %v190
        %v922 = vunpack.c.l.b16 %v191
        %v923 = vunpack.c.l.b16 %v193
        %v924 = vunpack.c.l.b16 %v194
        %v925 = vunpack.c.l.b16 %v196
        %v926 = vunpack.c.l.b16 %v197
        %v927 = vunpack.c.l.b16 %v199
        %v928 = vunpack.c.l.b16 %v200
        %v929 = vunpack.c.l.b16 %v202
        %v930 = vunpack.c.l.b16 %v203
        %v931 = vunpack.c.l.b16 %v205
        %v932 = vunpack.c.l.b16 %v206
        %v933 = vunpack.c.l.b16 %v208
        %v934 = vunpack.c.l.b16 %v209
        %v935 = vunpack.c.l.b16 %v211
        %v936 = vunpack.c.l.b16 %v212
        %v937 = vunpack.c.l.b16 %v214
        %v938 = vunpack.c.l.b16 %v215
        %v939 = vpack.c.b16 %v908, %v907
        %v940 = vpack.c.b16 %v910, %v909
        %v941 = vpack.c.b16 %v912, %v911
        %v942 = vpack.c.b16 %v914, %v913
        %v943 = vpack.c.b16 %v916, %v915
        %v944 = vpack.c.b16 %v918, %v917
        %v945 = vpack.c.b16 %v920, %v919
        %v946 = vpack.c.b16 %v922, %v921
        %v947 = vpack.c.b16 %v924, %v923
        %v948 = vpack.c.b16 %v926, %v925
        %v949 = vpack.c.b16 %v928, %v927
        %v950 = vpack.c.b16 %v930, %v929
        %v951 = vpack.c.b16 %v932, %v931
        %v952 = vpack.c.b16 %v934, %v933
        %v953 = vpack.c.b16 %v936, %v935
        %v954 = vpack.c.b16 %v938, %v937
        %v956 = vsel %vm661, %v939, 0
        %v959 = vsel %vm661, %v940, 0
        %v962 = vsel %vm661, %v941, 0
        %v965 = vsel %vm661, %v942, 0
        %v968 = vsel %vm661, %v943, 0
        %v971 = vsel %vm661, %v944, 0
        %v974 = vsel %vm661, %v945, 0
        %v977 = vsel %vm661, %v946, 0
        %v980 = vsel %vm661, %v947, 0
        %v983 = vsel %vm661, %v948, 0
        %v986 = vsel %vm661, %v949, 0
        %v989 = vsel %vm661, %v950, 0
        %v992 = vsel %vm661, %v951, 0
        %v995 = vsel %vm661, %v952, 0
        %v998 = vsel %vm661, %v953, 0
        %v1001 = vsel %vm661, %v954, 0
        %v1004 = vsel %vm710, %v223, 0
        %1006 = vmatprep.subr.bf16.mxu0 0
        %1007 = vmatpush1.bf16.msra.mxu0 %v1004
        %1008 = vmatprep.subr.bf16.mxu0 0
        %1009 = vmatpush1.bf16.msra.mxu0 0
        %1010 = vmatprep.subr.bf16.mxu0 0
        %1011 = vmatpush1.bf16.msra.mxu0 0
        %1012 = vmatprep.subr.bf16.mxu0 0
        %1013 = vmatpush1.bf16.msra.mxu0 0
        %1014 = vmatprep.subr.bf16.mxu0 0
        %1015 = vmatpush1.bf16.msra.mxu0 0
        %1016 = vmatprep.subr.bf16.mxu0 0
        %1017 = vmatpush1.bf16.msra.mxu0 0
        %1018 = vmatprep.subr.bf16.mxu0 0
        %1019 = vmatpush1.bf16.msra.mxu0 0
        %1020 = vmatprep.subr.bf16.mxu0 0
        %1021 = vmatpush1.bf16.msra.mxu0 0
        %1022 = vmatprep.subr.bf16.mxu0 0
        %1023 = vmatpush1.bf16.msra.mxu0 0
        %1024 = vmatprep.subr.bf16.mxu0 0
        %1025 = vmatpush1.bf16.msra.mxu0 0
        %1026 = vmatprep.subr.bf16.mxu0 0
        %1027 = vmatpush1.bf16.msra.mxu0 0
        %1028 = vmatprep.subr.bf16.mxu0 0
        %1029 = vmatpush1.bf16.msra.mxu0 0
        %1030 = vmatprep.subr.bf16.mxu0 0
        %1031 = vmatpush1.bf16.msra.mxu0 0
        %1032 = vmatprep.subr.bf16.mxu0 0
        %1033 = vmatpush1.bf16.msra.mxu0 0
        %1034 = vmatprep.subr.bf16.mxu0 0
        %1035 = vmatpush1.bf16.msra.mxu0 0
        %1036 = vmatprep.subr.bf16.mxu0 0
        %1037 = vmatpush1.bf16.msra.mxu0 0
        %1038 = vmatprep.mubr.bf16.mxu0 0
        %1039 = vmatmul.mubr.bf16.gmra.mrb[0].mxu0 %v956
        %v1040 = vpop.f32.mrb[0].mxu0
        %v1041 = vadd.f32 %v749, %v1040
        %v1042 = vpop.f32.mrb[0].mxu0
        %v1043 = vpop.f32.mrb[0].mxu0
        %v1044 = vadd.f32 %v752, %v1043
        %v1045 = vpop.f32.mrb[0].mxu0
        %1046 = vmatprep.mubr.bf16.mxu0 0
        %1047 = vmatmul.mubr.bf16.gmra.mrb[0].mxu0 %v959
        %v1048 = vpop.f32.mrb[0].mxu0
        %v1049 = vadd.f32 %v757, %v1048
        %v1050 = vpop.f32.mrb[0].mxu0
        %v1051 = vpop.f32.mrb[0].mxu0
        %v1052 = vadd.f32 %v760, %v1051
        %v1053 = vpop.f32.mrb[0].mxu0
        %1054 = vmatprep.mubr.bf16.mxu0 0
        %1055 = vmatmul.mubr.bf16.gmra.mrb[0].mxu0 %v962
        %v1056 = vpop.f32.mrb[0].mxu0
        %v1057 = vadd.f32 %v765, %v1056
        %v1058 = vpop.f32.mrb[0].mxu0
        %v1059 = vpop.f32.mrb[0].mxu0
        %v1060 = vadd.f32 %v768, %v1059
        %v1061 = vpop.f32.mrb[0].mxu0
        %1062 = vmatprep.mubr.bf16.mxu0 0
        %1063 = vmatmul.mubr.bf16.gmra.mrb[0].mxu0 %v965
        %v1064 = vpop.f32.mrb[0].mxu0
        %v1065 = vadd.f32 %v773, %v1064
        %v1066 = vpop.f32.mrb[0].mxu0
        %v1067 = vpop.f32.mrb[0].mxu0
        %v1068 = vadd.f32 %v776, %v1067
        %v1069 = vpop.f32.mrb[0].mxu0
        %1070 = vmatprep.mubr.bf16.mxu0 0
        %1071 = vmatmul.mubr.bf16.gmra.mrb[0].mxu0 %v968
        %v1072 = vpop.f32.mrb[0].mxu0
        %v1073 = vadd.f32 %v781, %v1072
        %v1074 = vpop.f32.mrb[0].mxu0
        %v1075 = vpop.f32.mrb[0].mxu0
        %v1076 = vadd.f32 %v784, %v1075
        %v1077 = vpop.f32.mrb[0].mxu0
        %1078 = vmatprep.mubr.bf16.mxu0 0
        %1079 = vmatmul.mubr.bf16.gmra.mrb[0].mxu0 %v971
        %v1080 = vpop.f32.mrb[0].mxu0
        %v1081 = vadd.f32 %v789, %v1080
        %v1082 = vpop.f32.mrb[0].mxu0
        %v1083 = vpop.f32.mrb[0].mxu0
        %v1084 = vadd.f32 %v792, %v1083
        %v1085 = vpop.f32.mrb[0].mxu0
        %1086 = vmatprep.mubr.bf16.mxu0 0
        %1087 = vmatmul.mubr.bf16.gmra.mrb[0].mxu0 %v974
        %v1088 = vpop.f32.mrb[0].mxu0
        %v1089 = vadd.f32 %v797, %v1088
        %v1090 = vpop.f32.mrb[0].mxu0
        %v1091 = vpop.f32.mrb[0].mxu0
        %v1092 = vadd.f32 %v800, %v1091
        %v1093 = vpop.f32.mrb[0].mxu0
        %1094 = vmatprep.mubr.bf16.mxu0 0
        %1095 = vmatmul.mubr.bf16.gmra.mrb[0].mxu0 %v977
        %v1096 = vpop.f32.mrb[0].mxu0
        %v1097 = vadd.f32 %v805, %v1096
        %v1098 = vpop.f32.mrb[0].mxu0
        %v1099 = vpop.f32.mrb[0].mxu0
        %v1100 = vadd.f32 %v808, %v1099
        %v1101 = vpop.f32.mrb[0].mxu0
        %1102 = vmatprep.mubr.bf16.mxu0 0
        %1103 = vmatmul.mubr.bf16.gmra.mrb[0].mxu0 %v980
        %v1104 = vpop.f32.mrb[0].mxu0
        %v1105 = vadd.f32 %v813, %v1104
        %v1106 = vpop.f32.mrb[0].mxu0
        %v1107 = vpop.f32.mrb[0].mxu0
        %v1108 = vadd.f32 %v816, %v1107
        %v1109 = vpop.f32.mrb[0].mxu0
        %1110 = vmatprep.mubr.bf16.mxu0 0
        %1111 = vmatmul.mubr.bf16.gmra.mrb[0].mxu0 %v983
        %v1112 = vpop.f32.mrb[0].mxu0
        %v1113 = vadd.f32 %v821, %v1112
        %v1114 = vpop.f32.mrb[0].mxu0
        %v1115 = vpop.f32.mrb[0].mxu0
        %v1116 = vadd.f32 %v824, %v1115
        %v1117 = vpop.f32.mrb[0].mxu0
        %1118 = vmatprep.mubr.bf16.mxu0 0
        %1119 = vmatmul.mubr.bf16.gmra.mrb[0].mxu0 %v986
        %v1120 = vpop.f32.mrb[0].mxu0
        %v1121 = vadd.f32 %v829, %v1120
        %v1122 = vpop.f32.mrb[0].mxu0
        %v1123 = vpop.f32.mrb[0].mxu0
        %v1124 = vadd.f32 %v832, %v1123
        %v1125 = vpop.f32.mrb[0].mxu0
        %1126 = vmatprep.mubr.bf16.mxu0 0
        %1127 = vmatmul.mubr.bf16.gmra.mrb[0].mxu0 %v989
        %v1128 = vpop.f32.mrb[0].mxu0
        %v1129 = vadd.f32 %v837, %v1128
        %v1130 = vpop.f32.mrb[0].mxu0
        %v1131 = vpop.f32.mrb[0].mxu0
        %v1132 = vadd.f32 %v840, %v1131
        %v1133 = vpop.f32.mrb[0].mxu0
        %1134 = vmatprep.mubr.bf16.mxu0 0
        %1135 = vmatmul.mubr.bf16.gmra.mrb[0].mxu0 %v992
        %v1136 = vpop.f32.mrb[0].mxu0
        %v1137 = vadd.f32 %v845, %v1136
        %v1138 = vpop.f32.mrb[0].mxu0
        %v1139 = vpop.f32.mrb[0].mxu0
        %v1140 = vadd.f32 %v848, %v1139
        %v1141 = vpop.f32.mrb[0].mxu0
        %1142 = vmatprep.mubr.bf16.mxu0 0
        %1143 = vmatmul.mubr.bf16.gmra.mrb[0].mxu0 %v995
        %v1144 = vpop.f32.mrb[0].mxu0
        %v1145 = vadd.f32 %v853, %v1144
        %v1146 = vpop.f32.mrb[0].mxu0
        %v1147 = vpop.f32.mrb[0].mxu0
        %v1148 = vadd.f32 %v856, %v1147
        %v1149 = vpop.f32.mrb[0].mxu0
        %1150 = vmatprep.mubr.bf16.mxu0 0
        %1151 = vmatmul.mubr.bf16.gmra.mrb[0].mxu0 %v998
        %v1152 = vpop.f32.mrb[0].mxu0
        %v1153 = vadd.f32 %v861, %v1152
        %v1154 = vpop.f32.mrb[0].mxu0
        %v1155 = vpop.f32.mrb[0].mxu0
        %v1156 = vadd.f32 %v864, %v1155
        %v1157 = vpop.f32.mrb[0].mxu0
        %1158 = vmatprep.mubr.bf16.mxu0 0
        %1159 = vmatmul.mubr.bf16.gmra.mrb[0].mxu0 %v1001
        %v1160 = vpop.f32.mrb[0].mxu0
        %v1161 = vadd.f32 %v869, %v1160
        %v1162 = vpop.f32.mrb[0].mxu0
        %v1163 = vpop.f32.mrb[0].mxu0
        %v1164 = vadd.f32 %v872, %v1163
        %v1165 = vpop.f32.mrb[0].mxu0
        %1166 = vdwg.mxu0
        %vm1183 = vcmask 1042432
        %vm1184 = vcmask 1046532
        %vm1185 = vmor %vm1183, %vm1184
        %v1186 = vrot.slane %v169, 5
        %v1187 = vrot.slane %v1186, 4
        %v1188 = vrot.slane %v170, 5
        %v1189 = vsel %vm1185, %v1187, %v1188
        %v1190 = vrot.slane %v1188, 4
        %v1191 = vrot.slane %v171, 5
        %v1192 = vsel %vm1185, %v1190, %v1191
        %v1193 = vrot.slane %v172, 5
        %v1194 = vrot.slane %v1193, 4
        %v1195 = vrot.slane %v173, 5
        %v1196 = vsel %vm1185, %v1194, %v1195
        %v1197 = vrot.slane %v1195, 4
        %v1198 = vrot.slane %v174, 5
        %v1199 = vsel %vm1185, %v1197, %v1198
        %v1200 = vrot.slane %v175, 5
        %v1201 = vrot.slane %v1200, 4
        %v1202 = vrot.slane %v176, 5
        %v1203 = vsel %vm1185, %v1201, %v1202
        %v1204 = vrot.slane %v1202, 4
        %v1205 = vrot.slane %v177, 5
        %v1206 = vsel %vm1185, %v1204, %v1205
        %v1207 = vrot.slane %v178, 5
        %v1208 = vrot.slane %v1207, 4
        %v1209 = vrot.slane %v179, 5
        %v1210 = vsel %vm1185, %v1208, %v1209
        %v1211 = vrot.slane %v1209, 4
        %v1212 = vrot.slane %v180, 5
        %v1213 = vsel %vm1185, %v1211, %v1212
        %v1214 = vrot.slane %v181, 5
        %v1215 = vrot.slane %v1214, 4
        %v1216 = vrot.slane %v182, 5
        %v1217 = vsel %vm1185, %v1215, %v1216
        %v1218 = vrot.slane %v1216, 4
        %v1219 = vrot.slane %v183, 5
        %v1220 = vsel %vm1185, %v1218, %v1219
        %v1221 = vrot.slane %v184, 5
        %v1222 = vrot.slane %v1221, 4
        %v1223 = vrot.slane %v185, 5
        %v1224 = vsel %vm1185, %v1222, %v1223
        %v1225 = vrot.slane %v1223, 4
        %v1226 = vrot.slane %v186, 5
        %v1227 = vsel %vm1185, %v1225, %v1226
        %v1228 = vrot.slane %v187, 5
        %v1229 = vrot.slane %v1228, 4
        %v1230 = vrot.slane %v188, 5
        %v1231 = vsel %vm1185, %v1229, %v1230
        %v1232 = vrot.slane %v1230, 4
        %v1233 = vrot.slane %v189, 5
        %v1234 = vsel %vm1185, %v1232, %v1233
        %v1235 = vrot.slane %v190, 5
        %v1236 = vrot.slane %v1235, 4
        %v1237 = vrot.slane %v191, 5
        %v1238 = vsel %vm1185, %v1236, %v1237
        %v1239 = vrot.slane %v1237, 4
        %v1240 = vrot.slane %v192, 5
        %v1241 = vsel %vm1185, %v1239, %v1240
        %v1242 = vrot.slane %v193, 5
        %v1243 = vrot.slane %v1242, 4
        %v1244 = vrot.slane %v194, 5
        %v1245 = vsel %vm1185, %v1243, %v1244
        %v1246 = vrot.slane %v1244, 4
        %v1247 = vrot.slane %v195, 5
        %v1248 = vsel %vm1185, %v1246, %v1247
        %v1249 = vrot.slane %v196, 5
        %v1250 = vrot.slane %v1249, 4
        %v1251 = vrot.slane %v197, 5
        %v1252 = vsel %vm1185, %v1250, %v1251
        %v1253 = vrot.slane %v1251, 4
        %v1254 = vrot.slane %v198, 5
        %v1255 = vsel %vm1185, %v1253, %v1254
        %v1256 = vrot.slane %v199, 5
        %v1257 = vrot.slane %v1256, 4
        %v1258 = vrot.slane %v200, 5
        %v1259 = vsel %vm1185, %v1257, %v1258
        %v1260 = vrot.slane %v1258, 4
        %v1261 = vrot.slane %v201, 5
        %v1262 = vsel %vm1185, %v1260, %v1261
        %v1263 = vrot.slane %v202, 5
        %v1264 = vrot.slane %v1263, 4
        %v1265 = vrot.slane %v203, 5
        %v1266 = vsel %vm1185, %v1264, %v1265
        %v1267 = vrot.slane %v1265, 4
        %v1268 = vrot.slane %v204, 5
        %v1269 = vsel %vm1185, %v1267, %v1268
        %v1270 = vrot.slane %v205, 5
        %v1271 = vrot.slane %v1270, 4
        %v1272 = vrot.slane %v206, 5
        %v1273 = vsel %vm1185, %v1271, %v1272
        %v1274 = vrot.slane %v1272, 4
        %v1275 = vrot.slane %v207, 5
        %v1276 = vsel %vm1185, %v1274, %v1275
        %v1277 = vrot.slane %v208, 5
        %v1278 = vrot.slane %v1277, 4
        %v1279 = vrot.slane %v209, 5
        %v1280 = vsel %vm1185, %v1278, %v1279
        %v1281 = vrot.slane %v1279, 4
        %v1282 = vrot.slane %v210, 5
        %v1283 = vsel %vm1185, %v1281, %v1282
        %v1284 = vrot.slane %v211, 5
        %v1285 = vrot.slane %v1284, 4
        %v1286 = vrot.slane %v212, 5
        %v1287 = vsel %vm1185, %v1285, %v1286
        %v1288 = vrot.slane %v1286, 4
        %v1289 = vrot.slane %v213, 5
        %v1290 = vsel %vm1185, %v1288, %v1289
        %v1291 = vrot.slane %v214, 5
        %v1292 = vrot.slane %v1291, 4
        %v1293 = vrot.slane %v215, 5
        %v1294 = vsel %vm1185, %v1292, %v1293
        %v1295 = vrot.slane %v1293, 4
        %v1296 = vrot.slane %v216, 5
        %v1297 = vsel %vm1185, %v1295, %v1296
        %s1298 = scalar_lea.vmem %s1, 4
        %v1299 = vld [vmem:[%s1298] sm:$0x3]
        %v1300 = vunpack.c.l.b16 %v1189
        %v1301 = vunpack.c.l.b16 %v1192
        %v1302 = vunpack.c.l.b16 %v1196
        %v1303 = vunpack.c.l.b16 %v1199
        %v1304 = vunpack.c.l.b16 %v1203
        %v1305 = vunpack.c.l.b16 %v1206
        %v1306 = vunpack.c.l.b16 %v1210
        %v1307 = vunpack.c.l.b16 %v1213
        %v1308 = vunpack.c.l.b16 %v1217
        %v1309 = vunpack.c.l.b16 %v1220
        %v1310 = vunpack.c.l.b16 %v1224
        %v1311 = vunpack.c.l.b16 %v1227
        %v1312 = vunpack.c.l.b16 %v1231
        %v1313 = vunpack.c.l.b16 %v1234
        %v1314 = vunpack.c.l.b16 %v1238
        %v1315 = vunpack.c.l.b16 %v1241
        %v1316 = vunpack.c.l.b16 %v1245
        %v1317 = vunpack.c.l.b16 %v1248
        %v1318 = vunpack.c.l.b16 %v1252
        %v1319 = vunpack.c.l.b16 %v1255
        %v1320 = vunpack.c.l.b16 %v1259
        %v1321 = vunpack.c.l.b16 %v1262
        %v1322 = vunpack.c.l.b16 %v1266
        %v1323 = vunpack.c.l.b16 %v1269
        %v1324 = vunpack.c.l.b16 %v1273
        %v1325 = vunpack.c.l.b16 %v1276
        %v1326 = vunpack.c.l.b16 %v1280
        %v1327 = vunpack.c.l.b16 %v1283
        %v1328 = vunpack.c.l.b16 %v1287
        %v1329 = vunpack.c.l.b16 %v1290
        %v1330 = vunpack.c.l.b16 %v1294
        %v1331 = vunpack.c.l.b16 %v1297
        %v1332 = vpack.c.b16 %v1301, %v1300
        %v1333 = vpack.c.b16 %v1303, %v1302
        %v1334 = vpack.c.b16 %v1305, %v1304
        %v1335 = vpack.c.b16 %v1307, %v1306
        %v1336 = vpack.c.b16 %v1309, %v1308
        %v1337 = vpack.c.b16 %v1311, %v1310
        %v1338 = vpack.c.b16 %v1313, %v1312
        %v1339 = vpack.c.b16 %v1315, %v1314
        %v1340 = vpack.c.b16 %v1317, %v1316
        %v1341 = vpack.c.b16 %v1319, %v1318
        %v1342 = vpack.c.b16 %v1321, %v1320
        %v1343 = vpack.c.b16 %v1323, %v1322
        %v1344 = vpack.c.b16 %v1325, %v1324
        %v1345 = vpack.c.b16 %v1327, %v1326
        %v1346 = vpack.c.b16 %v1329, %v1328
        %v1347 = vpack.c.b16 %v1331, %v1330
        %v1349 = vsel %vm661, %v1332, 0
        %v1352 = vsel %vm661, %v1333, 0
        %v1355 = vsel %vm661, %v1334, 0
        %v1358 = vsel %vm661, %v1335, 0
        %v1361 = vsel %vm661, %v1336, 0
        %v1364 = vsel %vm661, %v1337, 0
        %v1367 = vsel %vm661, %v1338, 0
        %v1370 = vsel %vm661, %v1339, 0
        %v1373 = vsel %vm661, %v1340, 0
        %v1376 = vsel %vm661, %v1341, 0
        %v1379 = vsel %vm661, %v1342, 0
        %v1382 = vsel %vm661, %v1343, 0
        %v1385 = vsel %vm661, %v1344, 0
        %v1388 = vsel %vm661, %v1345, 0
        %v1391 = vsel %vm661, %v1346, 0
        %v1394 = vsel %vm661, %v1347, 0
        %v1397 = vsel %vm710, %v1299, 0
        %1399 = vmatprep.subr.bf16.mxu0 0
        %1400 = vmatpush1.bf16.msra.mxu0 %v1397
        %1401 = vmatprep.subr.bf16.mxu0 0
        %1402 = vmatpush1.bf16.msra.mxu0 0
        %1403 = vmatprep.subr.bf16.mxu0 0
        %1404 = vmatpush1.bf16.msra.mxu0 0
        %1405 = vmatprep.subr.bf16.mxu0 0
        %1406 = vmatpush1.bf16.msra.mxu0 0
        %1407 = vmatprep.subr.bf16.mxu0 0
        %1408 = vmatpush1.bf16.msra.mxu0 0
        %1409 = vmatprep.subr.bf16.mxu0 0
        %1410 = vmatpush1.bf16.msra.mxu0 0
        %1411 = vmatprep.subr.bf16.mxu0 0
        %1412 = vmatpush1.bf16.msra.mxu0 0
        %1413 = vmatprep.subr.bf16.mxu0 0
        %1414 = vmatpush1.bf16.msra.mxu0 0
        %1415 = vmatprep.subr.bf16.mxu0 0
        %1416 = vmatpush1.bf16.msra.mxu0 0
        %1417 = vmatprep.subr.bf16.mxu0 0
        %1418 = vmatpush1.bf16.msra.mxu0 0
        %1419 = vmatprep.subr.bf16.mxu0 0
        %1420 = vmatpush1.bf16.msra.mxu0 0
        %1421 = vmatprep.subr.bf16.mxu0 0
        %1422 = vmatpush1.bf16.msra.mxu0 0
        %1423 = vmatprep.subr.bf16.mxu0 0
        %1424 = vmatpush1.bf16.msra.mxu0 0
        %1425 = vmatprep.subr.bf16.mxu0 0
        %1426 = vmatpush1.bf16.msra.mxu0 0
        %1427 = vmatprep.subr.bf16.mxu0 0
        %1428 = vmatpush1.bf16.msra.mxu0 0
        %1429 = vmatprep.subr.bf16.mxu0 0
        %1430 = vmatpush1.bf16.msra.mxu0 0
        %1431 = vmatprep.mubr.bf16.mxu0 0
        %1432 = vmatmul.mubr.bf16.gmra.mrb[0].mxu0 %v1349
        %v1433 = vpop.f32.mrb[0].mxu0
        %v1434 = vadd.f32 0.0, %v1433
        %v1435 = vpop.f32.mrb[0].mxu0
        %v1436 = vpop.f32.mrb[0].mxu0
        %v1437 = vadd.f32 0.0, %v1436
        %v1438 = vpop.f32.mrb[0].mxu0
        %1439 = vmatprep.mubr.bf16.mxu0 0
        %1440 = vmatmul.mubr.bf16.gmra.mrb[0].mxu0 %v1352
        %v1441 = vpop.f32.mrb[0].mxu0
        %v1442 = vadd.f32 0.0, %v1441
        %v1443 = vpop.f32.mrb[0].mxu0
        %v1444 = vpop.f32.mrb[0].mxu0
        %v1445 = vadd.f32 0.0, %v1444
        %v1446 = vpop.f32.mrb[0].mxu0
        %1447 = vmatprep.mubr.bf16.mxu0 0
        %1448 = vmatmul.mubr.bf16.gmra.mrb[0].mxu0 %v1355
        %v1449 = vpop.f32.mrb[0].mxu0
        %v1450 = vadd.f32 0.0, %v1449
        %v1451 = vpop.f32.mrb[0].mxu0
        %v1452 = vpop.f32.mrb[0].mxu0
        %v1453 = vadd.f32 0.0, %v1452
        %v1454 = vpop.f32.mrb[0].mxu0
        %1455 = vmatprep.mubr.bf16.mxu0 0
        %1456 = vmatmul.mubr.bf16.gmra.mrb[0].mxu0 %v1358
        %v1457 = vpop.f32.mrb[0].mxu0
        %v1458 = vadd.f32 0.0, %v1457
        %v1459 = vpop.f32.mrb[0].mxu0
        %v1460 = vpop.f32.mrb[0].mxu0
        %v1461 = vadd.f32 0.0, %v1460
        %v1462 = vpop.f32.mrb[0].mxu0
        %1463 = vmatprep.mubr.bf16.mxu0 0
        %1464 = vmatmul.mubr.bf16.gmra.mrb[0].mxu0 %v1361
        %v1465 = vpop.f32.mrb[0].mxu0
        %v1466 = vadd.f32 0.0, %v1465
        %v1467 = vpop.f32.mrb[0].mxu0
        %v1468 = vpop.f32.mrb[0].mxu0
        %v1469 = vadd.f32 0.0, %v1468
        %v1470 = vpop.f32.mrb[0].mxu0
        %1471 = vmatprep.mubr.bf16.mxu0 0
        %1472 = vmatmul.mubr.bf16.gmra.mrb[0].mxu0 %v1364
        %v1473 = vpop.f32.mrb[0].mxu0
        %v1474 = vadd.f32 0.0, %v1473
        %v1475 = vpop.f32.mrb[0].mxu0
        %v1476 = vpop.f32.mrb[0].mxu0
        %v1477 = vadd.f32 0.0, %v1476
        %v1478 = vpop.f32.mrb[0].mxu0
        %1479 = vmatprep.mubr.bf16.mxu0 0
        %1480 = vmatmul.mubr.bf16.gmra.mrb[0].mxu0 %v1367
        %v1481 = vpop.f32.mrb[0].mxu0
        %v1482 = vadd.f32 0.0, %v1481
        %v1483 = vpop.f32.mrb[0].mxu0
        %v1484 = vpop.f32.mrb[0].mxu0
        %v1485 = vadd.f32 0.0, %v1484
        %v1486 = vpop.f32.mrb[0].mxu0
        %1487 = vmatprep.mubr.bf16.mxu0 0
        %1488 = vmatmul.mubr.bf16.gmra.mrb[0].mxu0 %v1370
        %v1489 = vpop.f32.mrb[0].mxu0
        %v1490 = vadd.f32 0.0, %v1489
        %v1491 = vpop.f32.mrb[0].mxu0
        %v1492 = vpop.f32.mrb[0].mxu0
        %v1493 = vadd.f32 0.0, %v1492
        %v1494 = vpop.f32.mrb[0].mxu0
        %1495 = vmatprep.mubr.bf16.mxu0 0
        %1496 = vmatmul.mubr.bf16.gmra.mrb[0].mxu0 %v1373
        %v1497 = vpop.f32.mrb[0].mxu0
        %v1498 = vadd.f32 0.0, %v1497
        %v1499 = vpop.f32.mrb[0].mxu0
        %v1500 = vpop.f32.mrb[0].mxu0
        %v1501 = vadd.f32 0.0, %v1500
        %v1502 = vpop.f32.mrb[0].mxu0
        %1503 = vmatprep.mubr.bf16.mxu0 0
        %1504 = vmatmul.mubr.bf16.gmra.mrb[0].mxu0 %v1376
        %v1505 = vpop.f32.mrb[0].mxu0
        %v1506 = vadd.f32 0.0, %v1505
        %v1507 = vpop.f32.mrb[0].mxu0
        %v1508 = vpop.f32.mrb[0].mxu0
        %v1509 = vadd.f32 0.0, %v1508
        %v1510 = vpop.f32.mrb[0].mxu0
        %1511 = vmatprep.mubr.bf16.mxu0 0
        %1512 = vmatmul.mubr.bf16.gmra.mrb[0].mxu0 %v1379
        %v1513 = vpop.f32.mrb[0].mxu0
        %v1514 = vadd.f32 0.0, %v1513
        %v1515 = vpop.f32.mrb[0].mxu0
        %v1516 = vpop.f32.mrb[0].mxu0
        %v1517 = vadd.f32 0.0, %v1516
        %v1518 = vpop.f32.mrb[0].mxu0
        %1519 = vmatprep.mubr.bf16.mxu0 0
        %1520 = vmatmul.mubr.bf16.gmra.mrb[0].mxu0 %v1382
        %v1521 = vpop.f32.mrb[0].mxu0
        %v1522 = vadd.f32 0.0, %v1521
        %v1523 = vpop.f32.mrb[0].mxu0
        %v1524 = vpop.f32.mrb[0].mxu0
        %v1525 = vadd.f32 0.0, %v1524
        %v1526 = vpop.f32.mrb[0].mxu0
        %1527 = vmatprep.mubr.bf16.mxu0 0
        %1528 = vmatmul.mubr.bf16.gmra.mrb[0].mxu0 %v1385
        %v1529 = vpop.f32.mrb[0].mxu0
        %v1530 = vadd.f32 0.0, %v1529
        %v1531 = vpop.f32.mrb[0].mxu0
        %v1532 = vpop.f32.mrb[0].mxu0
        %v1533 = vadd.f32 0.0, %v1532
        %v1534 = vpop.f32.mrb[0].mxu0
        %1535 = vmatprep.mubr.bf16.mxu0 0
        %1536 = vmatmul.mubr.bf16.gmra.mrb[0].mxu0 %v1388
        %v1537 = vpop.f32.mrb[0].mxu0
        %v1538 = vadd.f32 0.0, %v1537
        %v1539 = vpop.f32.mrb[0].mxu0
        %v1540 = vpop.f32.mrb[0].mxu0
        %v1541 = vadd.f32 0.0, %v1540
        %v1542 = vpop.f32.mrb[0].mxu0
        %1543 = vmatprep.mubr.bf16.mxu0 0
        %1544 = vmatmul.mubr.bf16.gmra.mrb[0].mxu0 %v1391
        %v1545 = vpop.f32.mrb[0].mxu0
        %v1546 = vadd.f32 0.0, %v1545
        %v1547 = vpop.f32.mrb[0].mxu0
        %v1548 = vpop.f32.mrb[0].mxu0
        %v1549 = vadd.f32 0.0, %v1548
        %v1550 = vpop.f32.mrb[0].mxu0
        %1551 = vmatprep.mubr.bf16.mxu0 0
        %1552 = vmatmul.mubr.bf16.gmra.mrb[0].mxu0 %v1394
        %v1553 = vpop.f32.mrb[0].mxu0
        %v1554 = vadd.f32 0.0, %v1553
        %v1555 = vpop.f32.mrb[0].mxu0
        %v1556 = vpop.f32.mrb[0].mxu0
        %v1557 = vadd.f32 0.0, %v1556
        %v1558 = vpop.f32.mrb[0].mxu0
        %1559 = vdwg.mxu0
        %v1560 = vadd.f32 %v1041, %v1434
        %v1561 = vadd.f32 %v1044, %v1437
        %v1562 = vadd.f32 %v1049, %v1442
        %v1563 = vadd.f32 %v1052, %v1445
        %v1564 = vadd.f32 %v1057, %v1450
        %v1565 = vadd.f32 %v1060, %v1453
        %v1566 = vadd.f32 %v1065, %v1458
        %v1567 = vadd.f32 %v1068, %v1461
        %v1568 = vadd.f32 %v1073, %v1466
        %v1569 = vadd.f32 %v1076, %v1469
        %v1570 = vadd.f32 %v1081, %v1474
        %v1571 = vadd.f32 %v1084, %v1477
        %v1572 = vadd.f32 %v1089, %v1482
        %v1573 = vadd.f32 %v1092, %v1485
        %v1574 = vadd.f32 %v1097, %v1490
        %v1575 = vadd.f32 %v1100, %v1493
        %v1576 = vadd.f32 %v1105, %v1498
        %v1577 = vadd.f32 %v1108, %v1501
        %v1578 = vadd.f32 %v1113, %v1506
        %v1579 = vadd.f32 %v1116, %v1509
        %v1580 = vadd.f32 %v1121, %v1514
        %v1581 = vadd.f32 %v1124, %v1517
        %v1582 = vadd.f32 %v1129, %v1522
        %v1583 = vadd.f32 %v1132, %v1525
        %v1584 = vadd.f32 %v1137, %v1530
        %v1585 = vadd.f32 %v1140, %v1533
        %v1586 = vadd.f32 %v1145, %v1538
        %v1587 = vadd.f32 %v1148, %v1541
        %v1588 = vadd.f32 %v1153, %v1546
        %v1589 = vadd.f32 %v1156, %v1549
        %v1590 = vadd.f32 %v1161, %v1554
        %v1591 = vadd.f32 %v1164, %v1557
        %s1592 = scalar_lea.vmem %s1, 6
        %v1593 = vld [vmem:[%s1592] sm:$0x3]
        %v1596 = vunpack.c.l.b16 %v217
        %v1597 = vunpack.c.l.b16 %v218
        %v1598 = vpack.c.b16 %v1597, %v1596
        %v1600 = vsel %vm661, %v1598, 0
        %v1603 = vsel %vm710, %v1593, 0
        %1605 = vmatprep.subr.bf16.mxu0 0
        %1606 = vmatpush1.bf16.msra.mxu0 %v1603
        %1607 = vmatprep.subr.bf16.mxu0 0
        %1608 = vmatpush1.bf16.msra.mxu0 0
        %1609 = vmatprep.subr.bf16.mxu0 0
        %1610 = vmatpush1.bf16.msra.mxu0 0
        %1611 = vmatprep.subr.bf16.mxu0 0
        %1612 = vmatpush1.bf16.msra.mxu0 0
        %1613 = vmatprep.subr.bf16.mxu0 0
        %1614 = vmatpush1.bf16.msra.mxu0 0
        %1615 = vmatprep.subr.bf16.mxu0 0
        %1616 = vmatpush1.bf16.msra.mxu0 0
        %1617 = vmatprep.subr.bf16.mxu0 0
        %1618 = vmatpush1.bf16.msra.mxu0 0
        %1619 = vmatprep.subr.bf16.mxu0 0
        %1620 = vmatpush1.bf16.msra.mxu0 0
        %1621 = vmatprep.subr.bf16.mxu0 0
        %1622 = vmatpush1.bf16.msra.mxu0 0
        %1623 = vmatprep.subr.bf16.mxu0 0
        %1624 = vmatpush1.bf16.msra.mxu0 0
        %1625 = vmatprep.subr.bf16.mxu0 0
        %1626 = vmatpush1.bf16.msra.mxu0 0
        %1627 = vmatprep.subr.bf16.mxu0 0
        %1628 = vmatpush1.bf16.msra.mxu0 0
        %1629 = vmatprep.subr.bf16.mxu0 0
        %1630 = vmatpush1.bf16.msra.mxu0 0
        %1631 = vmatprep.subr.bf16.mxu0 0
        %1632 = vmatpush1.bf16.msra.mxu0 0
        %1633 = vmatprep.subr.bf16.mxu0 0
        %1634 = vmatpush1.bf16.msra.mxu0 0
        %1635 = vmatprep.subr.bf16.mxu0 0
        %1636 = vmatpush1.bf16.msra.mxu0 0
        %1637 = vmatprep.mubr.bf16.mxu0 0
        %1638 = vmatmul.mubr.bf16.gmra.mrb[0].mxu0 %v959
        %v1639 = vpop.f32.mrb[0].mxu0
        %v1640 = vadd.f32 0.0, %v1639
        %v1641 = vpop.f32.mrb[0].mxu0
        %v1642 = vpop.f32.mrb[0].mxu0
        %v1643 = vadd.f32 0.0, %v1642
        %v1644 = vpop.f32.mrb[0].mxu0
        %1645 = vmatprep.mubr.bf16.mxu0 0
        %1646 = vmatmul.mubr.bf16.gmra.mrb[0].mxu0 %v962
        %v1647 = vpop.f32.mrb[0].mxu0
        %v1648 = vadd.f32 0.0, %v1647
        %v1649 = vpop.f32.mrb[0].mxu0
        %v1650 = vpop.f32.mrb[0].mxu0
        %v1651 = vadd.f32 0.0, %v1650
        %v1652 = vpop.f32.mrb[0].mxu0
        %1653 = vmatprep.mubr.bf16.mxu0 0
        %1654 = vmatmul.mubr.bf16.gmra.mrb[0].mxu0 %v965
        %v1655 = vpop.f32.mrb[0].mxu0
        %v1656 = vadd.f32 0.0, %v1655
        %v1657 = vpop.f32.mrb[0].mxu0
        %v1658 = vpop.f32.mrb[0].mxu0
        %v1659 = vadd.f32 0.0, %v1658
        %v1660 = vpop.f32.mrb[0].mxu0
        %1661 = vmatprep.mubr.bf16.mxu0 0
        %1662 = vmatmul.mubr.bf16.gmra.mrb[0].mxu0 %v968
        %v1663 = vpop.f32.mrb[0].mxu0
        %v1664 = vadd.f32 0.0, %v1663
        %v1665 = vpop.f32.mrb[0].mxu0
        %v1666 = vpop.f32.mrb[0].mxu0
        %v1667 = vadd.f32 0.0, %v1666
        %v1668 = vpop.f32.mrb[0].mxu0
        %1669 = vmatprep.mubr.bf16.mxu0 0
        %1670 = vmatmul.mubr.bf16.gmra.mrb[0].mxu0 %v971
        %v1671 = vpop.f32.mrb[0].mxu0
        %v1672 = vadd.f32 0.0, %v1671
        %v1673 = vpop.f32.mrb[0].mxu0
        %v1674 = vpop.f32.mrb[0].mxu0
        %v1675 = vadd.f32 0.0, %v1674
        %v1676 = vpop.f32.mrb[0].mxu0
        %1677 = vmatprep.mubr.bf16.mxu0 0
        %1678 = vmatmul.mubr.bf16.gmra.mrb[0].mxu0 %v974
        %v1679 = vpop.f32.mrb[0].mxu0
        %v1680 = vadd.f32 0.0, %v1679
        %v1681 = vpop.f32.mrb[0].mxu0
        %v1682 = vpop.f32.mrb[0].mxu0
        %v1683 = vadd.f32 0.0, %v1682
        %v1684 = vpop.f32.mrb[0].mxu0
        %1685 = vmatprep.mubr.bf16.mxu0 0
        %1686 = vmatmul.mubr.bf16.gmra.mrb[0].mxu0 %v977
        %v1687 = vpop.f32.mrb[0].mxu0
        %v1688 = vadd.f32 0.0, %v1687
        %v1689 = vpop.f32.mrb[0].mxu0
        %v1690 = vpop.f32.mrb[0].mxu0
        %v1691 = vadd.f32 0.0, %v1690
        %v1692 = vpop.f32.mrb[0].mxu0
        %1693 = vmatprep.mubr.bf16.mxu0 0
        %1694 = vmatmul.mubr.bf16.gmra.mrb[0].mxu0 %v980
        %v1695 = vpop.f32.mrb[0].mxu0
        %v1696 = vadd.f32 0.0, %v1695
        %v1697 = vpop.f32.mrb[0].mxu0
        %v1698 = vpop.f32.mrb[0].mxu0
        %v1699 = vadd.f32 0.0, %v1698
        %v1700 = vpop.f32.mrb[0].mxu0
        %1701 = vmatprep.mubr.bf16.mxu0 0
        %1702 = vmatmul.mubr.bf16.gmra.mrb[0].mxu0 %v983
        %v1703 = vpop.f32.mrb[0].mxu0
        %v1704 = vadd.f32 0.0, %v1703
        %v1705 = vpop.f32.mrb[0].mxu0
        %v1706 = vpop.f32.mrb[0].mxu0
        %v1707 = vadd.f32 0.0, %v1706
        %v1708 = vpop.f32.mrb[0].mxu0
        %1709 = vmatprep.mubr.bf16.mxu0 0
        %1710 = vmatmul.mubr.bf16.gmra.mrb[0].mxu0 %v986
        %v1711 = vpop.f32.mrb[0].mxu0
        %v1712 = vadd.f32 0.0, %v1711
        %v1713 = vpop.f32.mrb[0].mxu0
        %v1714 = vpop.f32.mrb[0].mxu0
        %v1715 = vadd.f32 0.0, %v1714
        %v1716 = vpop.f32.mrb[0].mxu0
        %1717 = vmatprep.mubr.bf16.mxu0 0
        %1718 = vmatmul.mubr.bf16.gmra.mrb[0].mxu0 %v989
        %v1719 = vpop.f32.mrb[0].mxu0
        %v1720 = vadd.f32 0.0, %v1719
        %v1721 = vpop.f32.mrb[0].mxu0
        %v1722 = vpop.f32.mrb[0].mxu0
        %v1723 = vadd.f32 0.0, %v1722
        %v1724 = vpop.f32.mrb[0].mxu0
        %1725 = vmatprep.mubr.bf16.mxu0 0
        %1726 = vmatmul.mubr.bf16.gmra.mrb[0].mxu0 %v992
        %v1727 = vpop.f32.mrb[0].mxu0
        %v1728 = vadd.f32 0.0, %v1727
        %v1729 = vpop.f32.mrb[0].mxu0
        %v1730 = vpop.f32.mrb[0].mxu0
        %v1731 = vadd.f32 0.0, %v1730
        %v1732 = vpop.f32.mrb[0].mxu0
        %1733 = vmatprep.mubr.bf16.mxu0 0
        %1734 = vmatmul.mubr.bf16.gmra.mrb[0].mxu0 %v995
        %v1735 = vpop.f32.mrb[0].mxu0
        %v1736 = vadd.f32 0.0, %v1735
        %v1737 = vpop.f32.mrb[0].mxu0
        %v1738 = vpop.f32.mrb[0].mxu0
        %v1739 = vadd.f32 0.0, %v1738
        %v1740 = vpop.f32.mrb[0].mxu0
        %1741 = vmatprep.mubr.bf16.mxu0 0
        %1742 = vmatmul.mubr.bf16.gmra.mrb[0].mxu0 %v998
        %v1743 = vpop.f32.mrb[0].mxu0
        %v1744 = vadd.f32 0.0, %v1743
        %v1745 = vpop.f32.mrb[0].mxu0
        %v1746 = vpop.f32.mrb[0].mxu0
        %v1747 = vadd.f32 0.0, %v1746
        %v1748 = vpop.f32.mrb[0].mxu0
        %1749 = vmatprep.mubr.bf16.mxu0 0
        %1750 = vmatmul.mubr.bf16.gmra.mrb[0].mxu0 %v1001
        %v1751 = vpop.f32.mrb[0].mxu0
        %v1752 = vadd.f32 0.0, %v1751
        %v1753 = vpop.f32.mrb[0].mxu0
        %v1754 = vpop.f32.mrb[0].mxu0
        %v1755 = vadd.f32 0.0, %v1754
        %v1756 = vpop.f32.mrb[0].mxu0
        %1757 = vmatprep.mubr.bf16.mxu0 0
        %1758 = vmatmul.mubr.bf16.gmra.mrb[0].mxu0 %v1600
        %v1759 = vpop.f32.mrb[0].mxu0
        %v1760 = vadd.f32 0.0, %v1759
        %v1761 = vpop.f32.mrb[0].mxu0
        %v1762 = vpop.f32.mrb[0].mxu0
        %v1763 = vadd.f32 0.0, %v1762
        %v1764 = vpop.f32.mrb[0].mxu0
        %1765 = vdwg.mxu0
        %v1766 = vadd.f32 %v1560, %v1640
        %v1767 = vadd.f32 %v1561, %v1643
        %v1768 = vadd.f32 %v1562, %v1648
        %v1769 = vadd.f32 %v1563, %v1651
        %v1770 = vadd.f32 %v1564, %v1656
        %v1771 = vadd.f32 %v1565, %v1659
        %v1772 = vadd.f32 %v1566, %v1664
        %v1773 = vadd.f32 %v1567, %v1667
        %v1774 = vadd.f32 %v1568, %v1672
        %v1775 = vadd.f32 %v1569, %v1675
        %v1776 = vadd.f32 %v1570, %v1680
        %v1777 = vadd.f32 %v1571, %v1683
        %v1778 = vadd.f32 %v1572, %v1688
        %v1779 = vadd.f32 %v1573, %v1691
        %v1780 = vadd.f32 %v1574, %v1696
        %v1781 = vadd.f32 %v1575, %v1699
        %v1782 = vadd.f32 %v1576, %v1704
        %v1783 = vadd.f32 %v1577, %v1707
        %v1784 = vadd.f32 %v1578, %v1712
        %v1785 = vadd.f32 %v1579, %v1715
        %v1786 = vadd.f32 %v1580, %v1720
        %v1787 = vadd.f32 %v1581, %v1723
        %v1788 = vadd.f32 %v1582, %v1728
        %v1789 = vadd.f32 %v1583, %v1731
        %v1790 = vadd.f32 %v1584, %v1736
        %v1791 = vadd.f32 %v1585, %v1739
        %v1792 = vadd.f32 %v1586, %v1744
        %v1793 = vadd.f32 %v1587, %v1747
        %v1794 = vadd.f32 %v1588, %v1752
        %v1795 = vadd.f32 %v1589, %v1755
        %v1796 = vadd.f32 %v1590, %v1760
        %v1797 = vadd.f32 %v1591, %v1763
        %v1799 = vshrl.u32 %v217, 16
        %v1801 = vrot.slane %v1799, 4
        %v1802 = vshll.u32 %v217, 16
        %v1804 = vrot.slane %v1802, 5
        %v1805 = vor.u32 %v1801, %v1804
        %v1806 = vrot.slane %v1805, 4
        %v1808 = vshll.u32 %v218, 16
        %v1810 = vrot.slane %v1808, 5
        %v1811 = vsel %vm226, %v1806, %v1810
        %v1812 = vshrl.u32 %v218, 16
        %v1814 = vrot.slane %v1812, 4
        %v1815 = vor.u32 %v1814, %v1810
        %v1816 = vrot.slane %v1815, 4
        %v1818 = vshll.u32 %v219, 16
        %v1820 = vrot.slane %v1818, 5
        %v1821 = vsel %vm226, %v1816, %v1820
        %s1822 = scalar_lea.vmem %s1, 8
        %v1823 = vld [vmem:[%s1822] sm:$0x3]
        %v1824 = vunpack.c.l.b16 %v1811
        %v1825 = vunpack.c.l.b16 %v1821
        %v1826 = vpack.c.b16 %v1825, %v1824
        %v1828 = vsel %vm661, %v1826, 0
        %v1831 = vsel %vm710, %v1823, 0
        %1833 = vmatprep.subr.bf16.mxu0 0
        %1834 = vmatpush1.bf16.msra.mxu0 %v1831
        %1835 = vmatprep.subr.bf16.mxu0 0
        %1836 = vmatpush1.bf16.msra.mxu0 0
        %1837 = vmatprep.subr.bf16.mxu0 0
        %1838 = vmatpush1.bf16.msra.mxu0 0
        %1839 = vmatprep.subr.bf16.mxu0 0
        %1840 = vmatpush1.bf16.msra.mxu0 0
        %1841 = vmatprep.subr.bf16.mxu0 0
        %1842 = vmatpush1.bf16.msra.mxu0 0
        %1843 = vmatprep.subr.bf16.mxu0 0
        %1844 = vmatpush1.bf16.msra.mxu0 0
        %1845 = vmatprep.subr.bf16.mxu0 0
        %1846 = vmatpush1.bf16.msra.mxu0 0
        %1847 = vmatprep.subr.bf16.mxu0 0
        %1848 = vmatpush1.bf16.msra.mxu0 0
        %1849 = vmatprep.subr.bf16.mxu0 0
        %1850 = vmatpush1.bf16.msra.mxu0 0
        %1851 = vmatprep.subr.bf16.mxu0 0
        %1852 = vmatpush1.bf16.msra.mxu0 0
        %1853 = vmatprep.subr.bf16.mxu0 0
        %1854 = vmatpush1.bf16.msra.mxu0 0
        %1855 = vmatprep.subr.bf16.mxu0 0
        %1856 = vmatpush1.bf16.msra.mxu0 0
        %1857 = vmatprep.subr.bf16.mxu0 0
        %1858 = vmatpush1.bf16.msra.mxu0 0
        %1859 = vmatprep.subr.bf16.mxu0 0
        %1860 = vmatpush1.bf16.msra.mxu0 0
        %1861 = vmatprep.subr.bf16.mxu0 0
        %1862 = vmatpush1.bf16.msra.mxu0 0
        %1863 = vmatprep.subr.bf16.mxu0 0
        %1864 = vmatpush1.bf16.msra.mxu0 0
        %1865 = vmatprep.mubr.bf16.mxu0 0
        %1866 = vmatmul.mubr.bf16.gmra.mrb[0].mxu0 %v666
        %v1867 = vpop.f32.mrb[0].mxu0
        %v1868 = vadd.f32 0.0, %v1867
        %v1869 = vpop.f32.mrb[0].mxu0
        %v1870 = vpop.f32.mrb[0].mxu0
        %v1871 = vadd.f32 0.0, %v1870
        %v1872 = vpop.f32.mrb[0].mxu0
        %1873 = vmatprep.mubr.bf16.mxu0 0
        %1874 = vmatmul.mubr.bf16.gmra.mrb[0].mxu0 %v669
        %v1875 = vpop.f32.mrb[0].mxu0
        %v1876 = vadd.f32 0.0, %v1875
        %v1877 = vpop.f32.mrb[0].mxu0
        %v1878 = vpop.f32.mrb[0].mxu0
        %v1879 = vadd.f32 0.0, %v1878
        %v1880 = vpop.f32.mrb[0].mxu0
        %1881 = vmatprep.mubr.bf16.mxu0 0
        %1882 = vmatmul.mubr.bf16.gmra.mrb[0].mxu0 %v672
        %v1883 = vpop.f32.mrb[0].mxu0
        %v1884 = vadd.f32 0.0, %v1883
        %v1885 = vpop.f32.mrb[0].mxu0
        %v1886 = vpop.f32.mrb[0].mxu0
        %v1887 = vadd.f32 0.0, %v1886
        %v1888 = vpop.f32.mrb[0].mxu0
        %1889 = vmatprep.mubr.bf16.mxu0 0
        %1890 = vmatmul.mubr.bf16.gmra.mrb[0].mxu0 %v675
        %v1891 = vpop.f32.mrb[0].mxu0
        %v1892 = vadd.f32 0.0, %v1891
        %v1893 = vpop.f32.mrb[0].mxu0
        %v1894 = vpop.f32.mrb[0].mxu0
        %v1895 = vadd.f32 0.0, %v1894
        %v1896 = vpop.f32.mrb[0].mxu0
        %1897 = vmatprep.mubr.bf16.mxu0 0
        %1898 = vmatmul.mubr.bf16.gmra.mrb[0].mxu0 %v678
        %v1899 = vpop.f32.mrb[0].mxu0
        %v1900 = vadd.f32 0.0, %v1899
        %v1901 = vpop.f32.mrb[0].mxu0
        %v1902 = vpop.f32.mrb[0].mxu0
        %v1903 = vadd.f32 0.0, %v1902
        %v1904 = vpop.f32.mrb[0].mxu0
        %1905 = vmatprep.mubr.bf16.mxu0 0
        %1906 = vmatmul.mubr.bf16.gmra.mrb[0].mxu0 %v681
        %v1907 = vpop.f32.mrb[0].mxu0
        %v1908 = vadd.f32 0.0, %v1907
        %v1909 = vpop.f32.mrb[0].mxu0
        %v1910 = vpop.f32.mrb[0].mxu0
        %v1911 = vadd.f32 0.0, %v1910
        %v1912 = vpop.f32.mrb[0].mxu0
        %1913 = vmatprep.mubr.bf16.mxu0 0
        %1914 = vmatmul.mubr.bf16.gmra.mrb[0].mxu0 %v684
        %v1915 = vpop.f32.mrb[0].mxu0
        %v1916 = vadd.f32 0.0, %v1915
        %v1917 = vpop.f32.mrb[0].mxu0
        %v1918 = vpop.f32.mrb[0].mxu0
        %v1919 = vadd.f32 0.0, %v1918
        %v1920 = vpop.f32.mrb[0].mxu0
        %1921 = vmatprep.mubr.bf16.mxu0 0
        %1922 = vmatmul.mubr.bf16.gmra.mrb[0].mxu0 %v687
        %v1923 = vpop.f32.mrb[0].mxu0
        %v1924 = vadd.f32 0.0, %v1923
        %v1925 = vpop.f32.mrb[0].mxu0
        %v1926 = vpop.f32.mrb[0].mxu0
        %v1927 = vadd.f32 0.0, %v1926
        %v1928 = vpop.f32.mrb[0].mxu0
        %1929 = vmatprep.mubr.bf16.mxu0 0
        %1930 = vmatmul.mubr.bf16.gmra.mrb[0].mxu0 %v690
        %v1931 = vpop.f32.mrb[0].mxu0
        %v1932 = vadd.f32 0.0, %v1931
        %v1933 = vpop.f32.mrb[0].mxu0
        %v1934 = vpop.f32.mrb[0].mxu0
        %v1935 = vadd.f32 0.0, %v1934
        %v1936 = vpop.f32.mrb[0].mxu0
        %1937 = vmatprep.mubr.bf16.mxu0 0
        %1938 = vmatmul.mubr.bf16.gmra.mrb[0].mxu0 %v693
        %v1939 = vpop.f32.mrb[0].mxu0
        %v1940 = vadd.f32 0.0, %v1939
        %v1941 = vpop.f32.mrb[0].mxu0
        %v1942 = vpop.f32.mrb[0].mxu0
        %v1943 = vadd.f32 0.0, %v1942
        %v1944 = vpop.f32.mrb[0].mxu0
        %1945 = vmatprep.mubr.bf16.mxu0 0
        %1946 = vmatmul.mubr.bf16.gmra.mrb[0].mxu0 %v696
        %v1947 = vpop.f32.mrb[0].mxu0
        %v1948 = vadd.f32 0.0, %v1947
        %v1949 = vpop.f32.mrb[0].mxu0
        %v1950 = vpop.f32.mrb[0].mxu0
        %v1951 = vadd.f32 0.0, %v1950
        %v1952 = vpop.f32.mrb[0].mxu0
        %1953 = vmatprep.mubr.bf16.mxu0 0
        %1954 = vmatmul.mubr.bf16.gmra.mrb[0].mxu0 %v699
        %v1955 = vpop.f32.mrb[0].mxu0
        %v1956 = vadd.f32 0.0, %v1955
        %v1957 = vpop.f32.mrb[0].mxu0
        %v1958 = vpop.f32.mrb[0].mxu0
        %v1959 = vadd.f32 0.0, %v1958
        %v1960 = vpop.f32.mrb[0].mxu0
        %1961 = vmatprep.mubr.bf16.mxu0 0
        %1962 = vmatmul.mubr.bf16.gmra.mrb[0].mxu0 %v702
        %v1963 = vpop.f32.mrb[0].mxu0
        %v1964 = vadd.f32 0.0, %v1963
        %v1965 = vpop.f32.mrb[0].mxu0
        %v1966 = vpop.f32.mrb[0].mxu0
        %v1967 = vadd.f32 0.0, %v1966
        %v1968 = vpop.f32.mrb[0].mxu0
        %1969 = vmatprep.mubr.bf16.mxu0 0
        %1970 = vmatmul.mubr.bf16.gmra.mrb[0].mxu0 %v705
        %v1971 = vpop.f32.mrb[0].mxu0
        %v1972 = vadd.f32 0.0, %v1971
        %v1973 = vpop.f32.mrb[0].mxu0
        %v1974 = vpop.f32.mrb[0].mxu0
        %v1975 = vadd.f32 0.0, %v1974
        %v1976 = vpop.f32.mrb[0].mxu0
        %1977 = vmatprep.mubr.bf16.mxu0 0
        %1978 = vmatmul.mubr.bf16.gmra.mrb[0].mxu0 %v708
        %v1979 = vpop.f32.mrb[0].mxu0
        %v1980 = vadd.f32 0.0, %v1979
        %v1981 = vpop.f32.mrb[0].mxu0
        %v1982 = vpop.f32.mrb[0].mxu0
        %v1983 = vadd.f32 0.0, %v1982
        %v1984 = vpop.f32.mrb[0].mxu0
        %1985 = vmatprep.mubr.bf16.mxu0 0
        %1986 = vmatmul.mubr.bf16.gmra.mrb[0].mxu0 %v1828
        %v1987 = vpop.f32.mrb[0].mxu0
        %v1988 = vadd.f32 0.0, %v1987
        %v1989 = vpop.f32.mrb[0].mxu0
        %v1990 = vpop.f32.mrb[0].mxu0
        %v1991 = vadd.f32 0.0, %v1990
        %v1992 = vpop.f32.mrb[0].mxu0
        %1993 = vdwg.mxu0
        %v1994 = vadd.f32 %v1766, %v1868
        %v1995 = vadd.f32 %v1767, %v1871
        %v1996 = vadd.f32 %v1768, %v1876
        %v1997 = vadd.f32 %v1769, %v1879
        %v1998 = vadd.f32 %v1770, %v1884
        %v1999 = vadd.f32 %v1771, %v1887
        %v2000 = vadd.f32 %v1772, %v1892
        %v2001 = vadd.f32 %v1773, %v1895
        %v2002 = vadd.f32 %v1774, %v1900
        %v2003 = vadd.f32 %v1775, %v1903
        %v2004 = vadd.f32 %v1776, %v1908
        %v2005 = vadd.f32 %v1777, %v1911
        %v2006 = vadd.f32 %v1778, %v1916
        %v2007 = vadd.f32 %v1779, %v1919
        %v2008 = vadd.f32 %v1780, %v1924
        %v2009 = vadd.f32 %v1781, %v1927
        %v2010 = vadd.f32 %v1782, %v1932
        %v2011 = vadd.f32 %v1783, %v1935
        %v2012 = vadd.f32 %v1784, %v1940
        %v2013 = vadd.f32 %v1785, %v1943
        %v2014 = vadd.f32 %v1786, %v1948
        %v2015 = vadd.f32 %v1787, %v1951
        %v2016 = vadd.f32 %v1788, %v1956
        %v2017 = vadd.f32 %v1789, %v1959
        %v2018 = vadd.f32 %v1790, %v1964
        %v2019 = vadd.f32 %v1791, %v1967
        %v2020 = vadd.f32 %v1792, %v1972
        %v2021 = vadd.f32 %v1793, %v1975
        %v2022 = vadd.f32 %v1794, %v1980
        %v2023 = vadd.f32 %v1795, %v1983
        %v2024 = vadd.f32 %v1796, %v1988
        %v2025 = vadd.f32 %v1797, %v1991
        %v2027 = vrot.slane %v217, 5
        %v2028 = vrot.slane %v2027, 4
        %v2029 = vrot.slane %v218, 5
        %v2030 = vsel %vm1185, %v2028, %v2029
        %v2031 = vrot.slane %v2029, 4
        %v2032 = vrot.slane %v219, 5
        %v2033 = vsel %vm1185, %v2031, %v2032
        %s2034 = scalar_lea.vmem %s1, 10
        %v2035 = vld [vmem:[%s2034] sm:$0x3]
        %v2036 = vunpack.c.l.b16 %v2030
        %v2037 = vunpack.c.l.b16 %v2033
        %v2038 = vpack.c.b16 %v2037, %v2036
        %v2040 = vsel %vm661, %v2038, 0
        %v2043 = vsel %vm710, %v2035, 0
        %2045 = vmatprep.subr.bf16.mxu0 0
        %2046 = vmatpush1.bf16.msra.mxu0 %v2043
        %2047 = vmatprep.subr.bf16.mxu0 0
        %2048 = vmatpush1.bf16.msra.mxu0 0
        %2049 = vmatprep.subr.bf16.mxu0 0
        %2050 = vmatpush1.bf16.msra.mxu0 0
        %2051 = vmatprep.subr.bf16.mxu0 0
        %2052 = vmatpush1.bf16.msra.mxu0 0
        %2053 = vmatprep.subr.bf16.mxu0 0
        %2054 = vmatpush1.bf16.msra.mxu0 0
        %2055 = vmatprep.subr.bf16.mxu0 0
        %2056 = vmatpush1.bf16.msra.mxu0 0
        %2057 = vmatprep.subr.bf16.mxu0 0
        %2058 = vmatpush1.bf16.msra.mxu0 0
        %2059 = vmatprep.subr.bf16.mxu0 0
        %2060 = vmatpush1.bf16.msra.mxu0 0
        %2061 = vmatprep.subr.bf16.mxu0 0
        %2062 = vmatpush1.bf16.msra.mxu0 0
        %2063 = vmatprep.subr.bf16.mxu0 0
        %2064 = vmatpush1.bf16.msra.mxu0 0
        %2065 = vmatprep.subr.bf16.mxu0 0
        %2066 = vmatpush1.bf16.msra.mxu0 0
        %2067 = vmatprep.subr.bf16.mxu0 0
        %2068 = vmatpush1.bf16.msra.mxu0 0
        %2069 = vmatprep.subr.bf16.mxu0 0
        %2070 = vmatpush1.bf16.msra.mxu0 0
        %2071 = vmatprep.subr.bf16.mxu0 0
        %2072 = vmatpush1.bf16.msra.mxu0 0
        %2073 = vmatprep.subr.bf16.mxu0 0
        %2074 = vmatpush1.bf16.msra.mxu0 0
        %2075 = vmatprep.subr.bf16.mxu0 0
        %2076 = vmatpush1.bf16.msra.mxu0 0
        %2077 = vmatprep.mubr.bf16.mxu0 0
        %2078 = vmatmul.mubr.bf16.gmra.mrb[0].mxu0 %v1352
        %v2079 = vpop.f32.mrb[0].mxu0
        %v2080 = vadd.f32 0.0, %v2079
        %v2081 = vpop.f32.mrb[0].mxu0
        %v2082 = vpop.f32.mrb[0].mxu0
        %v2083 = vadd.f32 0.0, %v2082
        %v2084 = vpop.f32.mrb[0].mxu0
        %2085 = vmatprep.mubr.bf16.mxu0 0
        %2086 = vmatmul.mubr.bf16.gmra.mrb[0].mxu0 %v1355
        %v2087 = vpop.f32.mrb[0].mxu0
        %v2088 = vadd.f32 0.0, %v2087
        %v2089 = vpop.f32.mrb[0].mxu0
        %v2090 = vpop.f32.mrb[0].mxu0
        %v2091 = vadd.f32 0.0, %v2090
        %v2092 = vpop.f32.mrb[0].mxu0
        %2093 = vmatprep.mubr.bf16.mxu0 0
        %2094 = vmatmul.mubr.bf16.gmra.mrb[0].mxu0 %v1358
        %v2095 = vpop.f32.mrb[0].mxu0
        %v2096 = vadd.f32 0.0, %v2095
        %v2097 = vpop.f32.mrb[0].mxu0
        %v2098 = vpop.f32.mrb[0].mxu0
        %v2099 = vadd.f32 0.0, %v2098
        %v2100 = vpop.f32.mrb[0].mxu0
        %2101 = vmatprep.mubr.bf16.mxu0 0
        %2102 = vmatmul.mubr.bf16.gmra.mrb[0].mxu0 %v1361
        %v2103 = vpop.f32.mrb[0].mxu0
        %v2104 = vadd.f32 0.0, %v2103
        %v2105 = vpop.f32.mrb[0].mxu0
        %v2106 = vpop.f32.mrb[0].mxu0
        %v2107 = vadd.f32 0.0, %v2106
        %v2108 = vpop.f32.mrb[0].mxu0
        %2109 = vmatprep.mubr.bf16.mxu0 0
        %2110 = vmatmul.mubr.bf16.gmra.mrb[0].mxu0 %v1364
        %v2111 = vpop.f32.mrb[0].mxu0
        %v2112 = vadd.f32 0.0, %v2111
        %v2113 = vpop.f32.mrb[0].mxu0
        %v2114 = vpop.f32.mrb[0].mxu0
        %v2115 = vadd.f32 0.0, %v2114
        %v2116 = vpop.f32.mrb[0].mxu0
        %2117 = vmatprep.mubr.bf16.mxu0 0
        %2118 = vmatmul.mubr.bf16.gmra.mrb[0].mxu0 %v1367
        %v2119 = vpop.f32.mrb[0].mxu0
        %v2120 = vadd.f32 0.0, %v2119
        %v2121 = vpop.f32.mrb[0].mxu0
        %v2122 = vpop.f32.mrb[0].mxu0
        %v2123 = vadd.f32 0.0, %v2122
        %v2124 = vpop.f32.mrb[0].mxu0
        %2125 = vmatprep.mubr.bf16.mxu0 0
        %2126 = vmatmul.mubr.bf16.gmra.mrb[0].mxu0 %v1370
        %v2127 = vpop.f32.mrb[0].mxu0
        %v2128 = vadd.f32 0.0, %v2127
        %v2129 = vpop.f32.mrb[0].mxu0
        %v2130 = vpop.f32.mrb[0].mxu0
        %v2131 = vadd.f32 0.0, %v2130
        %v2132 = vpop.f32.mrb[0].mxu0
        %2133 = vmatprep.mubr.bf16.mxu0 0
        %2134 = vmatmul.mubr.bf16.gmra.mrb[0].mxu0 %v1373
        %v2135 = vpop.f32.mrb[0].mxu0
        %v2136 = vadd.f32 0.0, %v2135
        %v2137 = vpop.f32.mrb[0].mxu0
        %v2138 = vpop.f32.mrb[0].mxu0
        %v2139 = vadd.f32 0.0, %v2138
        %v2140 = vpop.f32.mrb[0].mxu0
        %2141 = vmatprep.mubr.bf16.mxu0 0
        %2142 = vmatmul.mubr.bf16.gmra.mrb[0].mxu0 %v1376
        %v2143 = vpop.f32.mrb[0].mxu0
        %v2144 = vadd.f32 0.0, %v2143
        %v2145 = vpop.f32.mrb[0].mxu0
        %v2146 = vpop.f32.mrb[0].mxu0
        %v2147 = vadd.f32 0.0, %v2146
        %v2148 = vpop.f32.mrb[0].mxu0
        %2149 = vmatprep.mubr.bf16.mxu0 0
        %2150 = vmatmul.mubr.bf16.gmra.mrb[0].mxu0 %v1379
        %v2151 = vpop.f32.mrb[0].mxu0
        %v2152 = vadd.f32 0.0, %v2151
        %v2153 = vpop.f32.mrb[0].mxu0
        %v2154 = vpop.f32.mrb[0].mxu0
        %v2155 = vadd.f32 0.0, %v2154
        %v2156 = vpop.f32.mrb[0].mxu0
        %2157 = vmatprep.mubr.bf16.mxu0 0
        %2158 = vmatmul.mubr.bf16.gmra.mrb[0].mxu0 %v1382
        %v2159 = vpop.f32.mrb[0].mxu0
        %v2160 = vadd.f32 0.0, %v2159
        %v2161 = vpop.f32.mrb[0].mxu0
        %v2162 = vpop.f32.mrb[0].mxu0
        %v2163 = vadd.f32 0.0, %v2162
        %v2164 = vpop.f32.mrb[0].mxu0
        %2165 = vmatprep.mubr.bf16.mxu0 0
        %2166 = vmatmul.mubr.bf16.gmra.mrb[0].mxu0 %v1385
        %v2167 = vpop.f32.mrb[0].mxu0
        %v2168 = vadd.f32 0.0, %v2167
        %v2169 = vpop.f32.mrb[0].mxu0
        %v2170 = vpop.f32.mrb[0].mxu0
        %v2171 = vadd.f32 0.0, %v2170
        %v2172 = vpop.f32.mrb[0].mxu0
        %2173 = vmatprep.mubr.bf16.mxu0 0
        %2174 = vmatmul.mubr.bf16.gmra.mrb[0].mxu0 %v1388
        %v2175 = vpop.f32.mrb[0].mxu0
        %v2176 = vadd.f32 0.0, %v2175
        %v2177 = vpop.f32.mrb[0].mxu0
        %v2178 = vpop.f32.mrb[0].mxu0
        %v2179 = vadd.f32 0.0, %v2178
        %v2180 = vpop.f32.mrb[0].mxu0
        %2181 = vmatprep.mubr.bf16.mxu0 0
        %2182 = vmatmul.mubr.bf16.gmra.mrb[0].mxu0 %v1391
        %v2183 = vpop.f32.mrb[0].mxu0
        %v2184 = vadd.f32 0.0, %v2183
        %v2185 = vpop.f32.mrb[0].mxu0
        %v2186 = vpop.f32.mrb[0].mxu0
        %v2187 = vadd.f32 0.0, %v2186
        %v2188 = vpop.f32.mrb[0].mxu0
        %2189 = vmatprep.mubr.bf16.mxu0 0
        %2190 = vmatmul.mubr.bf16.gmra.mrb[0].mxu0 %v1394
        %v2191 = vpop.f32.mrb[0].mxu0
        %v2192 = vadd.f32 0.0, %v2191
        %v2193 = vpop.f32.mrb[0].mxu0
        %v2194 = vpop.f32.mrb[0].mxu0
        %v2195 = vadd.f32 0.0, %v2194
        %v2196 = vpop.f32.mrb[0].mxu0
        %2197 = vmatprep.mubr.bf16.mxu0 0
        %2198 = vmatmul.mubr.bf16.gmra.mrb[0].mxu0 %v2040
        %v2199 = vpop.f32.mrb[0].mxu0
        %v2200 = vadd.f32 0.0, %v2199
        %v2201 = vpop.f32.mrb[0].mxu0
        %v2202 = vpop.f32.mrb[0].mxu0
        %v2203 = vadd.f32 0.0, %v2202
        %v2204 = vpop.f32.mrb[0].mxu0
        %2205 = vdwg.mxu0
        %v2206 = vadd.f32 %v1994, %v2080
        %v2207 = vadd.f32 %v1995, %v2083
        %v2208 = vadd.f32 %v1996, %v2088
        %v2209 = vadd.f32 %v1997, %v2091
        %v2210 = vadd.f32 %v1998, %v2096
        %v2211 = vadd.f32 %v1999, %v2099
        %v2212 = vadd.f32 %v2000, %v2104
        %v2213 = vadd.f32 %v2001, %v2107
        %v2214 = vadd.f32 %v2002, %v2112
        %v2215 = vadd.f32 %v2003, %v2115
        %v2216 = vadd.f32 %v2004, %v2120
        %v2217 = vadd.f32 %v2005, %v2123
        %v2218 = vadd.f32 %v2006, %v2128
        %v2219 = vadd.f32 %v2007, %v2131
        %v2220 = vadd.f32 %v2008, %v2136
        %v2221 = vadd.f32 %v2009, %v2139
        %v2222 = vadd.f32 %v2010, %v2144
        %v2223 = vadd.f32 %v2011, %v2147
        %v2224 = vadd.f32 %v2012, %v2152
        %v2225 = vadd.f32 %v2013, %v2155
        %v2226 = vadd.f32 %v2014, %v2160
        %v2227 = vadd.f32 %v2015, %v2163
        %v2228 = vadd.f32 %v2016, %v2168
        %v2229 = vadd.f32 %v2017, %v2171
        %v2230 = vadd.f32 %v2018, %v2176
        %v2231 = vadd.f32 %v2019, %v2179
        %v2232 = vadd.f32 %v2020, %v2184
        %v2233 = vadd.f32 %v2021, %v2187
        %v2234 = vadd.f32 %v2022, %v2192
        %v2235 = vadd.f32 %v2023, %v2195
        %v2236 = vadd.f32 %v2024, %v2200
        %v2237 = vadd.f32 %v2025, %v2203
        %s2238 = scalar_lea.vmem %s1, 12
        %v2239 = vld [vmem:[%s2238] sm:$0x3]
        %v2242 = vunpack.c.l.b16 %v220
        %v2243 = vunpack.c.l.b16 %v221
        %v2244 = vpack.c.b16 %v2243, %v2242
        %v2246 = vsel %vm661, %v2244, 0
        %v2249 = vsel %vm710, %v2239, 0
        %2251 = vmatprep.subr.bf16.mxu0 0
        %2252 = vmatpush1.bf16.msra.mxu0 %v2249
        %2253 = vmatprep.subr.bf16.mxu0 0
        %2254 = vmatpush1.bf16.msra.mxu0 0
        %2255 = vmatprep.subr.bf16.mxu0 0
        %2256 = vmatpush1.bf16.msra.mxu0 0
        %2257 = vmatprep.subr.bf16.mxu0 0
        %2258 = vmatpush1.bf16.msra.mxu0 0
        %2259 = vmatprep.subr.bf16.mxu0 0
        %2260 = vmatpush1.bf16.msra.mxu0 0
        %2261 = vmatprep.subr.bf16.mxu0 0
        %2262 = vmatpush1.bf16.msra.mxu0 0
        %2263 = vmatprep.subr.bf16.mxu0 0
        %2264 = vmatpush1.bf16.msra.mxu0 0
        %2265 = vmatprep.subr.bf16.mxu0 0
        %2266 = vmatpush1.bf16.msra.mxu0 0
        %2267 = vmatprep.subr.bf16.mxu0 0
        %2268 = vmatpush1.bf16.msra.mxu0 0
        %2269 = vmatprep.subr.bf16.mxu0 0
        %2270 = vmatpush1.bf16.msra.mxu0 0
        %2271 = vmatprep.subr.bf16.mxu0 0
        %2272 = vmatpush1.bf16.msra.mxu0 0
        %2273 = vmatprep.subr.bf16.mxu0 0
        %2274 = vmatpush1.bf16.msra.mxu0 0
        %2275 = vmatprep.subr.bf16.mxu0 0
        %2276 = vmatpush1.bf16.msra.mxu0 0
        %2277 = vmatprep.subr.bf16.mxu0 0
        %2278 = vmatpush1.bf16.msra.mxu0 0
        %2279 = vmatprep.subr.bf16.mxu0 0
        %2280 = vmatpush1.bf16.msra.mxu0 0
        %2281 = vmatprep.subr.bf16.mxu0 0
        %2282 = vmatpush1.bf16.msra.mxu0 0
        %2283 = vmatprep.mubr.bf16.mxu0 0
        %2284 = vmatmul.mubr.bf16.gmra.mrb[0].mxu0 %v962
        %v2285 = vpop.f32.mrb[0].mxu0
        %v2286 = vadd.f32 0.0, %v2285
        %v2287 = vpop.f32.mrb[0].mxu0
        %v2288 = vpop.f32.mrb[0].mxu0
        %v2289 = vadd.f32 0.0, %v2288
        %v2290 = vpop.f32.mrb[0].mxu0
        %2291 = vmatprep.mubr.bf16.mxu0 0
        %2292 = vmatmul.mubr.bf16.gmra.mrb[0].mxu0 %v965
        %v2293 = vpop.f32.mrb[0].mxu0
        %v2294 = vadd.f32 0.0, %v2293
        %v2295 = vpop.f32.mrb[0].mxu0
        %v2296 = vpop.f32.mrb[0].mxu0
        %v2297 = vadd.f32 0.0, %v2296
        %v2298 = vpop.f32.mrb[0].mxu0
        %2299 = vmatprep.mubr.bf16.mxu0 0
        %2300 = vmatmul.mubr.bf16.gmra.mrb[0].mxu0 %v968
        %v2301 = vpop.f32.mrb[0].mxu0
        %v2302 = vadd.f32 0.0, %v2301
        %v2303 = vpop.f32.mrb[0].mxu0
        %v2304 = vpop.f32.mrb[0].mxu0
        %v2305 = vadd.f32 0.0, %v2304
        %v2306 = vpop.f32.mrb[0].mxu0
        %2307 = vmatprep.mubr.bf16.mxu0 0
        %2308 = vmatmul.mubr.bf16.gmra.mrb[0].mxu0 %v971
        %v2309 = vpop.f32.mrb[0].mxu0
        %v2310 = vadd.f32 0.0, %v2309
        %v2311 = vpop.f32.mrb[0].mxu0
        %v2312 = vpop.f32.mrb[0].mxu0
        %v2313 = vadd.f32 0.0, %v2312
        %v2314 = vpop.f32.mrb[0].mxu0
        %2315 = vmatprep.mubr.bf16.mxu0 0
        %2316 = vmatmul.mubr.bf16.gmra.mrb[0].mxu0 %v974
        %v2317 = vpop.f32.mrb[0].mxu0
        %v2318 = vadd.f32 0.0, %v2317
        %v2319 = vpop.f32.mrb[0].mxu0
        %v2320 = vpop.f32.mrb[0].mxu0
        %v2321 = vadd.f32 0.0, %v2320
        %v2322 = vpop.f32.mrb[0].mxu0
        %2323 = vmatprep.mubr.bf16.mxu0 0
        %2324 = vmatmul.mubr.bf16.gmra.mrb[0].mxu0 %v977
        %v2325 = vpop.f32.mrb[0].mxu0
        %v2326 = vadd.f32 0.0, %v2325
        %v2327 = vpop.f32.mrb[0].mxu0
        %v2328 = vpop.f32.mrb[0].mxu0
        %v2329 = vadd.f32 0.0, %v2328
        %v2330 = vpop.f32.mrb[0].mxu0
        %2331 = vmatprep.mubr.bf16.mxu0 0
        %2332 = vmatmul.mubr.bf16.gmra.mrb[0].mxu0 %v980
        %v2333 = vpop.f32.mrb[0].mxu0
        %v2334 = vadd.f32 0.0, %v2333
        %v2335 = vpop.f32.mrb[0].mxu0
        %v2336 = vpop.f32.mrb[0].mxu0
        %v2337 = vadd.f32 0.0, %v2336
        %v2338 = vpop.f32.mrb[0].mxu0
        %2339 = vmatprep.mubr.bf16.mxu0 0
        %2340 = vmatmul.mubr.bf16.gmra.mrb[0].mxu0 %v983
        %v2341 = vpop.f32.mrb[0].mxu0
        %v2342 = vadd.f32 0.0, %v2341
        %v2343 = vpop.f32.mrb[0].mxu0
        %v2344 = vpop.f32.mrb[0].mxu0
        %v2345 = vadd.f32 0.0, %v2344
        %v2346 = vpop.f32.mrb[0].mxu0
        %2347 = vmatprep.mubr.bf16.mxu0 0
        %2348 = vmatmul.mubr.bf16.gmra.mrb[0].mxu0 %v986
        %v2349 = vpop.f32.mrb[0].mxu0
        %v2350 = vadd.f32 0.0, %v2349
        %v2351 = vpop.f32.mrb[0].mxu0
        %v2352 = vpop.f32.mrb[0].mxu0
        %v2353 = vadd.f32 0.0, %v2352
        %v2354 = vpop.f32.mrb[0].mxu0
        %2355 = vmatprep.mubr.bf16.mxu0 0
        %2356 = vmatmul.mubr.bf16.gmra.mrb[0].mxu0 %v989
        %v2357 = vpop.f32.mrb[0].mxu0
        %v2358 = vadd.f32 0.0, %v2357
        %v2359 = vpop.f32.mrb[0].mxu0
        %v2360 = vpop.f32.mrb[0].mxu0
        %v2361 = vadd.f32 0.0, %v2360
        %v2362 = vpop.f32.mrb[0].mxu0
        %2363 = vmatprep.mubr.bf16.mxu0 0
        %2364 = vmatmul.mubr.bf16.gmra.mrb[0].mxu0 %v992
        %v2365 = vpop.f32.mrb[0].mxu0
        %v2366 = vadd.f32 0.0, %v2365
        %v2367 = vpop.f32.mrb[0].mxu0
        %v2368 = vpop.f32.mrb[0].mxu0
        %v2369 = vadd.f32 0.0, %v2368
        %v2370 = vpop.f32.mrb[0].mxu0
        %2371 = vmatprep.mubr.bf16.mxu0 0
        %2372 = vmatmul.mubr.bf16.gmra.mrb[0].mxu0 %v995
        %v2373 = vpop.f32.mrb[0].mxu0
        %v2374 = vadd.f32 0.0, %v2373
        %v2375 = vpop.f32.mrb[0].mxu0
        %v2376 = vpop.f32.mrb[0].mxu0
        %v2377 = vadd.f32 0.0, %v2376
        %v2378 = vpop.f32.mrb[0].mxu0
        %2379 = vmatprep.mubr.bf16.mxu0 0
        %2380 = vmatmul.mubr.bf16.gmra.mrb[0].mxu0 %v998
        %v2381 = vpop.f32.mrb[0].mxu0
        %v2382 = vadd.f32 0.0, %v2381
        %v2383 = vpop.f32.mrb[0].mxu0
        %v2384 = vpop.f32.mrb[0].mxu0
        %v2385 = vadd.f32 0.0, %v2384
        %v2386 = vpop.f32.mrb[0].mxu0
        %2387 = vmatprep.mubr.bf16.mxu0 0
        %2388 = vmatmul.mubr.bf16.gmra.mrb[0].mxu0 %v1001
        %v2389 = vpop.f32.mrb[0].mxu0
        %v2390 = vadd.f32 0.0, %v2389
        %v2391 = vpop.f32.mrb[0].mxu0
        %v2392 = vpop.f32.mrb[0].mxu0
        %v2393 = vadd.f32 0.0, %v2392
        %v2394 = vpop.f32.mrb[0].mxu0
        %2395 = vmatprep.mubr.bf16.mxu0 0
        %2396 = vmatmul.mubr.bf16.gmra.mrb[0].mxu0 %v1600
        %v2397 = vpop.f32.mrb[0].mxu0
        %v2398 = vadd.f32 0.0, %v2397
        %v2399 = vpop.f32.mrb[0].mxu0
        %v2400 = vpop.f32.mrb[0].mxu0
        %v2401 = vadd.f32 0.0, %v2400
        %v2402 = vpop.f32.mrb[0].mxu0
        %2403 = vmatprep.mubr.bf16.mxu0 0
        %2404 = vmatmul.mubr.bf16.gmra.mrb[0].mxu0 %v2246
        %v2405 = vpop.f32.mrb[0].mxu0
        %v2406 = vadd.f32 0.0, %v2405
        %v2407 = vpop.f32.mrb[0].mxu0
        %v2408 = vpop.f32.mrb[0].mxu0
        %v2409 = vadd.f32 0.0, %v2408
        %v2410 = vpop.f32.mrb[0].mxu0
        %2411 = vdwg.mxu0
        %v2412 = vadd.f32 %v2206, %v2286
        %v2413 = vadd.f32 %v2207, %v2289
        %v2414 = vadd.f32 %v2208, %v2294
        %v2415 = vadd.f32 %v2209, %v2297
        %v2416 = vadd.f32 %v2210, %v2302
        %v2417 = vadd.f32 %v2211, %v2305
        %v2418 = vadd.f32 %v2212, %v2310
        %v2419 = vadd.f32 %v2213, %v2313
        %v2420 = vadd.f32 %v2214, %v2318
        %v2421 = vadd.f32 %v2215, %v2321
        %v2422 = vadd.f32 %v2216, %v2326
        %v2423 = vadd.f32 %v2217, %v2329
        %v2424 = vadd.f32 %v2218, %v2334
        %v2425 = vadd.f32 %v2219, %v2337
        %v2426 = vadd.f32 %v2220, %v2342
        %v2427 = vadd.f32 %v2221, %v2345
        %v2428 = vadd.f32 %v2222, %v2350
        %v2429 = vadd.f32 %v2223, %v2353
        %v2430 = vadd.f32 %v2224, %v2358
        %v2431 = vadd.f32 %v2225, %v2361
        %v2432 = vadd.f32 %v2226, %v2366
        %v2433 = vadd.f32 %v2227, %v2369
        %v2434 = vadd.f32 %v2228, %v2374
        %v2435 = vadd.f32 %v2229, %v2377
        %v2436 = vadd.f32 %v2230, %v2382
        %v2437 = vadd.f32 %v2231, %v2385
        %v2438 = vadd.f32 %v2232, %v2390
        %v2439 = vadd.f32 %v2233, %v2393
        %v2440 = vadd.f32 %v2234, %v2398
        %v2441 = vadd.f32 %v2235, %v2401
        %v2442 = vadd.f32 %v2236, %v2406
        %v2443 = vadd.f32 %v2237, %v2409
        %v2445 = vshrl.u32 %v220, 16
        %v2447 = vrot.slane %v2445, 4
        %v2448 = vshll.u32 %v220, 16
        %v2450 = vrot.slane %v2448, 5
        %v2451 = vor.u32 %v2447, %v2450
        %v2452 = vrot.slane %v2451, 4
        %v2454 = vshll.u32 %v221, 16
        %v2456 = vrot.slane %v2454, 5
        %v2457 = vsel %vm226, %v2452, %v2456
        %v2458 = vshrl.u32 %v221, 16
        %v2460 = vrot.slane %v2458, 4
        %v2461 = vor.u32 %v2460, %v2456
        %v2462 = vrot.slane %v2461, 4
        %v2464 = vshll.u32 %v222, 16
        %v2466 = vrot.slane %v2464, 5
        %v2467 = vsel %vm226, %v2462, %v2466
        %s2468 = scalar_lea.vmem %s1, 14
        %v2469 = vld [vmem:[%s2468] sm:$0x3]
        %v2470 = vunpack.c.l.b16 %v2457
        %v2471 = vunpack.c.l.b16 %v2467
        %v2472 = vpack.c.b16 %v2471, %v2470
        %v2474 = vsel %vm661, %v2472, 0
        %v2477 = vsel %vm710, %v2469, 0
        %2479 = vmatprep.subr.bf16.mxu0 0
        %2480 = vmatpush1.bf16.msra.mxu0 %v2477
        %2481 = vmatprep.subr.bf16.mxu0 0
        %2482 = vmatpush1.bf16.msra.mxu0 0
        %2483 = vmatprep.subr.bf16.mxu0 0
        %2484 = vmatpush1.bf16.msra.mxu0 0
        %2485 = vmatprep.subr.bf16.mxu0 0
        %2486 = vmatpush1.bf16.msra.mxu0 0
        %2487 = vmatprep.subr.bf16.mxu0 0
        %2488 = vmatpush1.bf16.msra.mxu0 0
        %2489 = vmatprep.subr.bf16.mxu0 0
        %2490 = vmatpush1.bf16.msra.mxu0 0
        %2491 = vmatprep.subr.bf16.mxu0 0
        %2492 = vmatpush1.bf16.msra.mxu0 0
        %2493 = vmatprep.subr.bf16.mxu0 0
        %2494 = vmatpush1.bf16.msra.mxu0 0
        %2495 = vmatprep.subr.bf16.mxu0 0
        %2496 = vmatpush1.bf16.msra.mxu0 0
        %2497 = vmatprep.subr.bf16.mxu0 0
        %2498 = vmatpush1.bf16.msra.mxu0 0
        %2499 = vmatprep.subr.bf16.mxu0 0
        %2500 = vmatpush1.bf16.msra.mxu0 0
        %2501 = vmatprep.subr.bf16.mxu0 0
        %2502 = vmatpush1.bf16.msra.mxu0 0
        %2503 = vmatprep.subr.bf16.mxu0 0
        %2504 = vmatpush1.bf16.msra.mxu0 0
        %2505 = vmatprep.subr.bf16.mxu0 0
        %2506 = vmatpush1.bf16.msra.mxu0 0
        %2507 = vmatprep.subr.bf16.mxu0 0
        %2508 = vmatpush1.bf16.msra.mxu0 0
        %2509 = vmatprep.subr.bf16.mxu0 0
        %2510 = vmatpush1.bf16.msra.mxu0 0
        %2511 = vmatprep.mubr.bf16.mxu0 0
        %2512 = vmatmul.mubr.bf16.gmra.mrb[0].mxu0 %v669
        %v2513 = vpop.f32.mrb[0].mxu0
        %v2514 = vadd.f32 0.0, %v2513
        %v2515 = vpop.f32.mrb[0].mxu0
        %v2516 = vpop.f32.mrb[0].mxu0
        %v2517 = vadd.f32 0.0, %v2516
        %v2518 = vpop.f32.mrb[0].mxu0
        %2519 = vmatprep.mubr.bf16.mxu0 0
        %2520 = vmatmul.mubr.bf16.gmra.mrb[0].mxu0 %v672
        %v2521 = vpop.f32.mrb[0].mxu0
        %v2522 = vadd.f32 0.0, %v2521
        %v2523 = vpop.f32.mrb[0].mxu0
        %v2524 = vpop.f32.mrb[0].mxu0
        %v2525 = vadd.f32 0.0, %v2524
        %v2526 = vpop.f32.mrb[0].mxu0
        %2527 = vmatprep.mubr.bf16.mxu0 0
        %2528 = vmatmul.mubr.bf16.gmra.mrb[0].mxu0 %v675
        %v2529 = vpop.f32.mrb[0].mxu0
        %v2530 = vadd.f32 0.0, %v2529
        %v2531 = vpop.f32.mrb[0].mxu0
        %v2532 = vpop.f32.mrb[0].mxu0
        %v2533 = vadd.f32 0.0, %v2532
        %v2534 = vpop.f32.mrb[0].mxu0
        %2535 = vmatprep.mubr.bf16.mxu0 0
        %2536 = vmatmul.mubr.bf16.gmra.mrb[0].mxu0 %v678
        %v2537 = vpop.f32.mrb[0].mxu0
        %v2538 = vadd.f32 0.0, %v2537
        %v2539 = vpop.f32.mrb[0].mxu0
        %v2540 = vpop.f32.mrb[0].mxu0
        %v2541 = vadd.f32 0.0, %v2540
        %v2542 = vpop.f32.mrb[0].mxu0
        %2543 = vmatprep.mubr.bf16.mxu0 0
        %2544 = vmatmul.mubr.bf16.gmra.mrb[0].mxu0 %v681
        %v2545 = vpop.f32.mrb[0].mxu0
        %v2546 = vadd.f32 0.0, %v2545
        %v2547 = vpop.f32.mrb[0].mxu0
        %v2548 = vpop.f32.mrb[0].mxu0
        %v2549 = vadd.f32 0.0, %v2548
        %v2550 = vpop.f32.mrb[0].mxu0
        %2551 = vmatprep.mubr.bf16.mxu0 0
        %2552 = vmatmul.mubr.bf16.gmra.mrb[0].mxu0 %v684
        %v2553 = vpop.f32.mrb[0].mxu0
        %v2554 = vadd.f32 0.0, %v2553
        %v2555 = vpop.f32.mrb[0].mxu0
        %v2556 = vpop.f32.mrb[0].mxu0
        %v2557 = vadd.f32 0.0, %v2556
        %v2558 = vpop.f32.mrb[0].mxu0
        %2559 = vmatprep.mubr.bf16.mxu0 0
        %2560 = vmatmul.mubr.bf16.gmra.mrb[0].mxu0 %v687
        %v2561 = vpop.f32.mrb[0].mxu0
        %v2562 = vadd.f32 0.0, %v2561
        %v2563 = vpop.f32.mrb[0].mxu0
        %v2564 = vpop.f32.mrb[0].mxu0
        %v2565 = vadd.f32 0.0, %v2564
        %v2566 = vpop.f32.mrb[0].mxu0
        %2567 = vmatprep.mubr.bf16.mxu0 0
        %2568 = vmatmul.mubr.bf16.gmra.mrb[0].mxu0 %v690
        %v2569 = vpop.f32.mrb[0].mxu0
        %v2570 = vadd.f32 0.0, %v2569
        %v2571 = vpop.f32.mrb[0].mxu0
        %v2572 = vpop.f32.mrb[0].mxu0
        %v2573 = vadd.f32 0.0, %v2572
        %v2574 = vpop.f32.mrb[0].mxu0
        %2575 = vmatprep.mubr.bf16.mxu0 0
        %2576 = vmatmul.mubr.bf16.gmra.mrb[0].mxu0 %v693
        %v2577 = vpop.f32.mrb[0].mxu0
        %v2578 = vadd.f32 0.0, %v2577
        %v2579 = vpop.f32.mrb[0].mxu0
        %v2580 = vpop.f32.mrb[0].mxu0
        %v2581 = vadd.f32 0.0, %v2580
        %v2582 = vpop.f32.mrb[0].mxu0
        %2583 = vmatprep.mubr.bf16.mxu0 0
        %2584 = vmatmul.mubr.bf16.gmra.mrb[0].mxu0 %v696
        %v2585 = vpop.f32.mrb[0].mxu0
        %v2586 = vadd.f32 0.0, %v2585
        %v2587 = vpop.f32.mrb[0].mxu0
        %v2588 = vpop.f32.mrb[0].mxu0
        %v2589 = vadd.f32 0.0, %v2588
        %v2590 = vpop.f32.mrb[0].mxu0
        %2591 = vmatprep.mubr.bf16.mxu0 0
        %2592 = vmatmul.mubr.bf16.gmra.mrb[0].mxu0 %v699
        %v2593 = vpop.f32.mrb[0].mxu0
        %v2594 = vadd.f32 0.0, %v2593
        %v2595 = vpop.f32.mrb[0].mxu0
        %v2596 = vpop.f32.mrb[0].mxu0
        %v2597 = vadd.f32 0.0, %v2596
        %v2598 = vpop.f32.mrb[0].mxu0
        %2599 = vmatprep.mubr.bf16.mxu0 0
        %2600 = vmatmul.mubr.bf16.gmra.mrb[0].mxu0 %v702
        %v2601 = vpop.f32.mrb[0].mxu0
        %v2602 = vadd.f32 0.0, %v2601
        %v2603 = vpop.f32.mrb[0].mxu0
        %v2604 = vpop.f32.mrb[0].mxu0
        %v2605 = vadd.f32 0.0, %v2604
        %v2606 = vpop.f32.mrb[0].mxu0
        %2607 = vmatprep.mubr.bf16.mxu0 0
        %2608 = vmatmul.mubr.bf16.gmra.mrb[0].mxu0 %v705
        %v2609 = vpop.f32.mrb[0].mxu0
        %v2610 = vadd.f32 0.0, %v2609
        %v2611 = vpop.f32.mrb[0].mxu0
        %v2612 = vpop.f32.mrb[0].mxu0
        %v2613 = vadd.f32 0.0, %v2612
        %v2614 = vpop.f32.mrb[0].mxu0
        %2615 = vmatprep.mubr.bf16.mxu0 0
        %2616 = vmatmul.mubr.bf16.gmra.mrb[0].mxu0 %v708
        %v2617 = vpop.f32.mrb[0].mxu0
        %v2618 = vadd.f32 0.0, %v2617
        %v2619 = vpop.f32.mrb[0].mxu0
        %v2620 = vpop.f32.mrb[0].mxu0
        %v2621 = vadd.f32 0.0, %v2620
        %v2622 = vpop.f32.mrb[0].mxu0
        %2623 = vmatprep.mubr.bf16.mxu0 0
        %2624 = vmatmul.mubr.bf16.gmra.mrb[0].mxu0 %v1828
        %v2625 = vpop.f32.mrb[0].mxu0
        %v2626 = vadd.f32 0.0, %v2625
        %v2627 = vpop.f32.mrb[0].mxu0
        %v2628 = vpop.f32.mrb[0].mxu0
        %v2629 = vadd.f32 0.0, %v2628
        %v2630 = vpop.f32.mrb[0].mxu0
        %2631 = vmatprep.mubr.bf16.mxu0 0
        %2632 = vmatmul.mubr.bf16.gmra.mrb[0].mxu0 %v2474
        %v2633 = vpop.f32.mrb[0].mxu0
        %v2634 = vadd.f32 0.0, %v2633
        %v2635 = vpop.f32.mrb[0].mxu0
        %v2636 = vpop.f32.mrb[0].mxu0
        %v2637 = vadd.f32 0.0, %v2636
        %v2638 = vpop.f32.mrb[0].mxu0
        %2639 = vdwg.mxu0
        %v2640 = vadd.f32 %v2412, %v2514
        %v2641 = vadd.f32 %v2413, %v2517
        %v2642 = vadd.f32 %v2414, %v2522
        %v2643 = vadd.f32 %v2415, %v2525
        %v2644 = vadd.f32 %v2416, %v2530
        %v2645 = vadd.f32 %v2417, %v2533
        %v2646 = vadd.f32 %v2418, %v2538
        %v2647 = vadd.f32 %v2419, %v2541
        %v2648 = vadd.f32 %v2420, %v2546
        %v2649 = vadd.f32 %v2421, %v2549
        %v2650 = vadd.f32 %v2422, %v2554
        %v2651 = vadd.f32 %v2423, %v2557
        %v2652 = vadd.f32 %v2424, %v2562
        %v2653 = vadd.f32 %v2425, %v2565
        %v2654 = vadd.f32 %v2426, %v2570
        %v2655 = vadd.f32 %v2427, %v2573
        %v2656 = vadd.f32 %v2428, %v2578
        %v2657 = vadd.f32 %v2429, %v2581
        %v2658 = vadd.f32 %v2430, %v2586
        %v2659 = vadd.f32 %v2431, %v2589
        %v2660 = vadd.f32 %v2432, %v2594
        %v2661 = vadd.f32 %v2433, %v2597
        %v2662 = vadd.f32 %v2434, %v2602
        %v2663 = vadd.f32 %v2435, %v2605
        %v2664 = vadd.f32 %v2436, %v2610
        %v2665 = vadd.f32 %v2437, %v2613
        %v2666 = vadd.f32 %v2438, %v2618
        %v2667 = vadd.f32 %v2439, %v2621
        %v2668 = vadd.f32 %v2440, %v2626
        %v2669 = vadd.f32 %v2441, %v2629
        %v2670 = vadd.f32 %v2442, %v2634
        %v2671 = vadd.f32 %v2443, %v2637
        %v2673 = vrot.slane %v220, 5
        %v2674 = vrot.slane %v2673, 4
        %v2675 = vrot.slane %v221, 5
        %v2676 = vsel %vm1185, %v2674, %v2675
        %v2677 = vrot.slane %v2675, 4
        %v2678 = vrot.slane %v222, 5
        %v2679 = vsel %vm1185, %v2677, %v2678
        %s2680 = scalar_lea.vmem %s1, 16
        %v2681 = vld [vmem:[%s2680] sm:$0x3]
        %v2682 = vunpack.c.l.b16 %v2676
        %v2683 = vunpack.c.l.b16 %v2679
        %v2684 = vpack.c.b16 %v2683, %v2682
        %v2686 = vsel %vm661, %v2684, 0
        %v2689 = vsel %vm710, %v2681, 0
        %2691 = vmatprep.subr.bf16.mxu0 0
        %2692 = vmatpush1.bf16.msra.mxu0 %v2689
        %2693 = vmatprep.subr.bf16.mxu0 0
        %2694 = vmatpush1.bf16.msra.mxu0 0
        %2695 = vmatprep.subr.bf16.mxu0 0
        %2696 = vmatpush1.bf16.msra.mxu0 0
        %2697 = vmatprep.subr.bf16.mxu0 0
        %2698 = vmatpush1.bf16.msra.mxu0 0
        %2699 = vmatprep.subr.bf16.mxu0 0
        %2700 = vmatpush1.bf16.msra.mxu0 0
        %2701 = vmatprep.subr.bf16.mxu0 0
        %2702 = vmatpush1.bf16.msra.mxu0 0
        %2703 = vmatprep.subr.bf16.mxu0 0
        %2704 = vmatpush1.bf16.msra.mxu0 0
        %2705 = vmatprep.subr.bf16.mxu0 0
        %2706 = vmatpush1.bf16.msra.mxu0 0
        %2707 = vmatprep.subr.bf16.mxu0 0
        %2708 = vmatpush1.bf16.msra.mxu0 0
        %2709 = vmatprep.subr.bf16.mxu0 0
        %2710 = vmatpush1.bf16.msra.mxu0 0
        %2711 = vmatprep.subr.bf16.mxu0 0
        %2712 = vmatpush1.bf16.msra.mxu0 0
        %2713 = vmatprep.subr.bf16.mxu0 0
        %2714 = vmatpush1.bf16.msra.mxu0 0
        %2715 = vmatprep.subr.bf16.mxu0 0
        %2716 = vmatpush1.bf16.msra.mxu0 0
        %2717 = vmatprep.subr.bf16.mxu0 0
        %2718 = vmatpush1.bf16.msra.mxu0 0
        %2719 = vmatprep.subr.bf16.mxu0 0
        %2720 = vmatpush1.bf16.msra.mxu0 0
        %2721 = vmatprep.subr.bf16.mxu0 0
        %2722 = vmatpush1.bf16.msra.mxu0 0
        %2723 = vmatprep.mubr.bf16.mxu0 0
        %2724 = vmatmul.mubr.bf16.gmra.mrb[0].mxu0 %v1355
        %v2725 = vpop.f32.mrb[0].mxu0
        %v2726 = vadd.f32 0.0, %v2725
        %v2727 = vpop.f32.mrb[0].mxu0
        %v2728 = vpop.f32.mrb[0].mxu0
        %v2729 = vadd.f32 0.0, %v2728
        %v2730 = vpop.f32.mrb[0].mxu0
        %2731 = vmatprep.mubr.bf16.mxu0 0
        %2732 = vmatmul.mubr.bf16.gmra.mrb[0].mxu0 %v1358
        %v2733 = vpop.f32.mrb[0].mxu0
        %v2734 = vadd.f32 0.0, %v2733
        %v2735 = vpop.f32.mrb[0].mxu0
        %v2736 = vpop.f32.mrb[0].mxu0
        %v2737 = vadd.f32 0.0, %v2736
        %v2738 = vpop.f32.mrb[0].mxu0
        %2739 = vmatprep.mubr.bf16.mxu0 0
        %2740 = vmatmul.mubr.bf16.gmra.mrb[0].mxu0 %v1361
        %v2741 = vpop.f32.mrb[0].mxu0
        %v2742 = vadd.f32 0.0, %v2741
        %v2743 = vpop.f32.mrb[0].mxu0
        %v2744 = vpop.f32.mrb[0].mxu0
        %v2745 = vadd.f32 0.0, %v2744
        %v2746 = vpop.f32.mrb[0].mxu0
        %2747 = vmatprep.mubr.bf16.mxu0 0
        %2748 = vmatmul.mubr.bf16.gmra.mrb[0].mxu0 %v1364
        %v2749 = vpop.f32.mrb[0].mxu0
        %v2750 = vadd.f32 0.0, %v2749
        %v2751 = vpop.f32.mrb[0].mxu0
        %v2752 = vpop.f32.mrb[0].mxu0
        %v2753 = vadd.f32 0.0, %v2752
        %v2754 = vpop.f32.mrb[0].mxu0
        %2755 = vmatprep.mubr.bf16.mxu0 0
        %2756 = vmatmul.mubr.bf16.gmra.mrb[0].mxu0 %v1367
        %v2757 = vpop.f32.mrb[0].mxu0
        %v2758 = vadd.f32 0.0, %v2757
        %v2759 = vpop.f32.mrb[0].mxu0
        %v2760 = vpop.f32.mrb[0].mxu0
        %v2761 = vadd.f32 0.0, %v2760
        %v2762 = vpop.f32.mrb[0].mxu0
        %2763 = vmatprep.mubr.bf16.mxu0 0
        %2764 = vmatmul.mubr.bf16.gmra.mrb[0].mxu0 %v1370
        %v2765 = vpop.f32.mrb[0].mxu0
        %v2766 = vadd.f32 0.0, %v2765
        %v2767 = vpop.f32.mrb[0].mxu0
        %v2768 = vpop.f32.mrb[0].mxu0
        %v2769 = vadd.f32 0.0, %v2768
        %v2770 = vpop.f32.mrb[0].mxu0
        %2771 = vmatprep.mubr.bf16.mxu0 0
        %2772 = vmatmul.mubr.bf16.gmra.mrb[0].mxu0 %v1373
        %v2773 = vpop.f32.mrb[0].mxu0
        %v2774 = vadd.f32 0.0, %v2773
        %v2775 = vpop.f32.mrb[0].mxu0
        %v2776 = vpop.f32.mrb[0].mxu0
        %v2777 = vadd.f32 0.0, %v2776
        %v2778 = vpop.f32.mrb[0].mxu0
        %2779 = vmatprep.mubr.bf16.mxu0 0
        %2780 = vmatmul.mubr.bf16.gmra.mrb[0].mxu0 %v1376
        %v2781 = vpop.f32.mrb[0].mxu0
        %v2782 = vadd.f32 0.0, %v2781
        %v2783 = vpop.f32.mrb[0].mxu0
        %v2784 = vpop.f32.mrb[0].mxu0
        %v2785 = vadd.f32 0.0, %v2784
        %v2786 = vpop.f32.mrb[0].mxu0
        %2787 = vmatprep.mubr.bf16.mxu0 0
        %2788 = vmatmul.mubr.bf16.gmra.mrb[0].mxu0 %v1379
        %v2789 = vpop.f32.mrb[0].mxu0
        %v2790 = vadd.f32 0.0, %v2789
        %v2791 = vpop.f32.mrb[0].mxu0
        %v2792 = vpop.f32.mrb[0].mxu0
        %v2793 = vadd.f32 0.0, %v2792
        %v2794 = vpop.f32.mrb[0].mxu0
        %2795 = vmatprep.mubr.bf16.mxu0 0
        %2796 = vmatmul.mubr.bf16.gmra.mrb[0].mxu0 %v1382
        %v2797 = vpop.f32.mrb[0].mxu0
        %v2798 = vadd.f32 0.0, %v2797
        %v2799 = vpop.f32.mrb[0].mxu0
        %v2800 = vpop.f32.mrb[0].mxu0
        %v2801 = vadd.f32 0.0, %v2800
        %v2802 = vpop.f32.mrb[0].mxu0
        %2803 = vmatprep.mubr.bf16.mxu0 0
        %2804 = vmatmul.mubr.bf16.gmra.mrb[0].mxu0 %v1385
        %v2805 = vpop.f32.mrb[0].mxu0
        %v2806 = vadd.f32 0.0, %v2805
        %v2807 = vpop.f32.mrb[0].mxu0
        %v2808 = vpop.f32.mrb[0].mxu0
        %v2809 = vadd.f32 0.0, %v2808
        %v2810 = vpop.f32.mrb[0].mxu0
        %2811 = vmatprep.mubr.bf16.mxu0 0
        %2812 = vmatmul.mubr.bf16.gmra.mrb[0].mxu0 %v1388
        %v2813 = vpop.f32.mrb[0].mxu0
        %v2814 = vadd.f32 0.0, %v2813
        %v2815 = vpop.f32.mrb[0].mxu0
        %v2816 = vpop.f32.mrb[0].mxu0
        %v2817 = vadd.f32 0.0, %v2816
        %v2818 = vpop.f32.mrb[0].mxu0
        %2819 = vmatprep.mubr.bf16.mxu0 0
        %2820 = vmatmul.mubr.bf16.gmra.mrb[0].mxu0 %v1391
        %v2821 = vpop.f32.mrb[0].mxu0
        %v2822 = vadd.f32 0.0, %v2821
        %v2823 = vpop.f32.mrb[0].mxu0
        %v2824 = vpop.f32.mrb[0].mxu0
        %v2825 = vadd.f32 0.0, %v2824
        %v2826 = vpop.f32.mrb[0].mxu0
        %2827 = vmatprep.mubr.bf16.mxu0 0
        %2828 = vmatmul.mubr.bf16.gmra.mrb[0].mxu0 %v1394
        %v2829 = vpop.f32.mrb[0].mxu0
        %v2830 = vadd.f32 0.0, %v2829
        %v2831 = vpop.f32.mrb[0].mxu0
        %v2832 = vpop.f32.mrb[0].mxu0
        %v2833 = vadd.f32 0.0, %v2832
        %v2834 = vpop.f32.mrb[0].mxu0
        %2835 = vmatprep.mubr.bf16.mxu0 0
        %2836 = vmatmul.mubr.bf16.gmra.mrb[0].mxu0 %v2040
        %v2837 = vpop.f32.mrb[0].mxu0
        %v2838 = vadd.f32 0.0, %v2837
        %v2839 = vpop.f32.mrb[0].mxu0
        %v2840 = vpop.f32.mrb[0].mxu0
        %v2841 = vadd.f32 0.0, %v2840
        %v2842 = vpop.f32.mrb[0].mxu0
        %2843 = vmatprep.mubr.bf16.mxu0 0
        %2844 = vmatmul.mubr.bf16.gmra.mrb[0].mxu0 %v2686
        %v2845 = vpop.f32.mrb[0].mxu0
        %v2846 = vadd.f32 0.0, %v2845
        %v2847 = vpop.f32.mrb[0].mxu0
        %v2848 = vpop.f32.mrb[0].mxu0
        %v2849 = vadd.f32 0.0, %v2848
        %v2850 = vpop.f32.mrb[0].mxu0
        %2851 = vdwg.mxu0
        %v2852 = vadd.f32 %v2640, %v2726
        %v2853 = vadd.f32 %v2641, %v2729
        %v2854 = vadd.f32 %v2642, %v2734
        %v2855 = vadd.f32 %v2643, %v2737
        %v2856 = vadd.f32 %v2644, %v2742
        %v2857 = vadd.f32 %v2645, %v2745
        %v2858 = vadd.f32 %v2646, %v2750
        %v2859 = vadd.f32 %v2647, %v2753
        %v2860 = vadd.f32 %v2648, %v2758
        %v2861 = vadd.f32 %v2649, %v2761
        %v2862 = vadd.f32 %v2650, %v2766
        %v2863 = vadd.f32 %v2651, %v2769
        %v2864 = vadd.f32 %v2652, %v2774
        %v2865 = vadd.f32 %v2653, %v2777
        %v2866 = vadd.f32 %v2654, %v2782
        %v2867 = vadd.f32 %v2655, %v2785
        %v2868 = vadd.f32 %v2656, %v2790
        %v2869 = vadd.f32 %v2657, %v2793
        %v2870 = vadd.f32 %v2658, %v2798
        %v2871 = vadd.f32 %v2659, %v2801
        %v2872 = vadd.f32 %v2660, %v2806
        %v2873 = vadd.f32 %v2661, %v2809
        %v2874 = vadd.f32 %v2662, %v2814
        %v2875 = vadd.f32 %v2663, %v2817
        %v2876 = vadd.f32 %v2664, %v2822
        %v2877 = vadd.f32 %v2665, %v2825
        %v2878 = vadd.f32 %v2666, %v2830
        %v2879 = vadd.f32 %v2667, %v2833
        %v2880 = vadd.f32 %v2668, %v2838
        %v2881 = vadd.f32 %v2669, %v2841
        %v2882 = vadd.f32 %v2670, %v2846
        %v2883 = vadd.f32 %v2671, %v2849
        %v2884 = vld [vmem:[%s2] sm:$0x1]
        %v2886 = vlaneseq
        %v2887 = vshrl.u32 %v2886, 7
        %v2888 = vsub.s32 0, %v2887
        %v2889 = vrot.slane %v2884, %v2888
        %v2891 = vadd.f32 %v2852, %v2889
        %v2892 = vadd.f32 %v2853, %v2889
        %v2893 = vadd.f32 %v2854, %v2889
        %v2894 = vadd.f32 %v2855, %v2889
        %v2895 = vadd.f32 %v2856, %v2889
        %v2896 = vadd.f32 %v2857, %v2889
        %v2897 = vadd.f32 %v2858, %v2889
        %v2898 = vadd.f32 %v2859, %v2889
        %v2899 = vadd.f32 %v2860, %v2889
        %v2900 = vadd.f32 %v2861, %v2889
        %v2901 = vadd.f32 %v2862, %v2889
        %v2902 = vadd.f32 %v2863, %v2889
        %v2903 = vadd.f32 %v2864, %v2889
        %v2904 = vadd.f32 %v2865, %v2889
        %v2905 = vadd.f32 %v2866, %v2889
        %v2906 = vadd.f32 %v2867, %v2889
        %v2907 = vadd.f32 %v2868, %v2889
        %v2908 = vadd.f32 %v2869, %v2889
        %v2909 = vadd.f32 %v2870, %v2889
        %v2910 = vadd.f32 %v2871, %v2889
        %v2911 = vadd.f32 %v2872, %v2889
        %v2912 = vadd.f32 %v2873, %v2889
        %v2913 = vadd.f32 %v2874, %v2889
        %v2914 = vadd.f32 %v2875, %v2889
        %v2915 = vadd.f32 %v2876, %v2889
        %v2916 = vadd.f32 %v2877, %v2889
        %v2917 = vadd.f32 %v2878, %v2889
        %v2918 = vadd.f32 %v2879, %v2889
        %v2919 = vadd.f32 %v2880, %v2889
        %v2920 = vadd.f32 %v2881, %v2889
        %v2921 = vadd.f32 %v2882, %v2889
        %v2922 = vadd.f32 %v2883, %v2889
        %v2923 = vmax.f32 %v2891, 0.0
        %v2924 = vmax.f32 %v2892, 0.0
        %v2925 = vmax.f32 %v2893, 0.0
        %v2926 = vmax.f32 %v2894, 0.0
        %v2927 = vmax.f32 %v2895, 0.0
        %v2928 = vmax.f32 %v2896, 0.0
        %v2929 = vmax.f32 %v2897, 0.0
        %v2930 = vmax.f32 %v2898, 0.0
        %v2931 = vmax.f32 %v2899, 0.0
        %v2932 = vmax.f32 %v2900, 0.0
        %v2933 = vmax.f32 %v2901, 0.0
        %v2934 = vmax.f32 %v2902, 0.0
        %v2935 = vmax.f32 %v2903, 0.0
        %v2936 = vmax.f32 %v2904, 0.0
        %v2937 = vmax.f32 %v2905, 0.0
        %v2938 = vmax.f32 %v2906, 0.0
        %v2939 = vmax.f32 %v2907, 0.0
        %v2940 = vmax.f32 %v2908, 0.0
        %v2941 = vmax.f32 %v2909, 0.0
        %v2942 = vmax.f32 %v2910, 0.0
        %v2943 = vmax.f32 %v2911, 0.0
        %v2944 = vmax.f32 %v2912, 0.0
        %v2945 = vmax.f32 %v2913, 0.0
        %v2946 = vmax.f32 %v2914, 0.0
        %v2947 = vmax.f32 %v2915, 0.0
        %v2948 = vmax.f32 %v2916, 0.0
        %v2949 = vmax.f32 %v2917, 0.0
        %v2950 = vmax.f32 %v2918, 0.0
        %v2951 = vmax.f32 %v2919, 0.0
        %v2952 = vmax.f32 %v2920, 0.0
        %v2953 = vmax.f32 %v2921, 0.0
        %v2954 = vmax.f32 %v2922, 0.0
        %v2955 = vadd.f32 %v2923, %v2924
        %v2956 = vadd.f32 %v2955, %v2925
        %v2957 = vadd.f32 %v2956, %v2926
        %v2958 = vadd.f32 %v2957, %v2927
        %v2959 = vadd.f32 %v2958, %v2928
        %v2960 = vadd.f32 %v2959, %v2929
        %v2961 = vadd.f32 %v2960, %v2930
        %v2962 = vadd.f32 %v2961, %v2931
        %v2963 = vadd.f32 %v2962, %v2932
        %v2964 = vadd.f32 %v2963, %v2933
        %v2965 = vadd.f32 %v2964, %v2934
        %v2966 = vadd.f32 %v2965, %v2935
        %v2967 = vadd.f32 %v2966, %v2936
        %v2968 = vadd.f32 %v2967, %v2937
        %v2969 = vadd.f32 %v2968, %v2938
        %v2970 = vadd.f32 %v2969, %v2939
        %v2971 = vadd.f32 %v2970, %v2940
        %v2972 = vadd.f32 %v2971, %v2941
        %v2973 = vadd.f32 %v2972, %v2942
        %v2974 = vadd.f32 %v2973, %v2943
        %v2975 = vadd.f32 %v2974, %v2944
        %v2976 = vadd.f32 %v2975, %v2945
        %v2977 = vadd.f32 %v2976, %v2946
        %v2978 = vadd.f32 %v2977, %v2947
        %v2979 = vadd.f32 %v2978, %v2948
        %v2980 = vadd.f32 %v2979, %v2949
        %v2981 = vadd.f32 %v2980, %v2950
        %v2982 = vadd.f32 %v2981, %v2951
        %v2983 = vadd.f32 %v2982, %v2952
        %v2984 = vadd.f32 %v2983, %v2953
        %v2985 = vadd.f32 %v2984, %v2954
        %v2986 = vrot.slane %v2985, 4
        %v2987 = vadd.f32 %v2985, %v2986
        %v2988 = vrot.slane %v2987, 2
        %v2989 = vadd.f32 %v2987, %v2988
        %v2990 = vrot.slane %v2989, 1
        %v2991 = vadd.f32 %v2989, %v2990
        %v2992 = vrcp.pop 256.0
        %v2993 = vmul.f32 %v2991, %v2992
        %2994 = vst [vmem:[%s162] sm:$0x1] %v2993
        %s2995 = sand.u32 %s93, 1
        %s2996 = scalar_lea.sflag [#allocation3], %s2995
        %s2997 = sand.u32 %s93, 1
        %s2998 = scalar_lea.vmem [#allocation2], %s2997
        // Predicated region
        $region33: #{tpu_custom_call.1} parent=31 // pred_check
          %p2999 = pneg %p103
        $region34: #{tpu_custom_call.1} parent=31 // pred_check_branch
          %3001 = sbr.rel (%p2999) target = $region36
        $region35: #{tpu_custom_call.1} parent=31 // pred_region
          %s3003 = ssub.s32 16, 16
          %3004 = vsyncadd %s2996, %s3003
          %s3005 = smul.addr %s17, 16
          %s3006 = scalar_lea.hbm %s3, %s3005
          %s3008 = sshll.u32 %s2998, 4
          %s3009 = int_to_ptr.vmem [resolvable:$true] %s3008
          %3011 = dma.vmem_to_hbm [thread:$0]  %s3009, 16, %s3006, %s2996
        $region36: #{tpu_custom_call.1} parent=31 // pred_fallthru
          _
      $region32: #{tpu_custom_call.1} parent=5 // pred_fallthru
        _
      %p3012 = scmp.le.s32.totalorder 2, %s12
      // Predicated region
      $region37: #{tpu_custom_call.1} parent=5 // pred_check
        %p3013 = pneg %p3012
      $region38: #{tpu_custom_call.1} parent=5 // pred_check_branch
        %3015 = sbr.rel (%p3013) target = $region40
      $region39: #{tpu_custom_call.1} parent=5 // pred_region
        %s3016 = ssub.s32 %s12, 2
        // Predicated region
        $region41: #{tpu_custom_call.1} parent=39 // pred_check
          %p3017 = pneg %p109
        $region42: #{tpu_custom_call.1} parent=39 // pred_check_branch
          %3019 = sbr.rel (%p3017) target = $region44
        $region43: #{tpu_custom_call.1} parent=39 // pred_region
          %s3020 = sand.u32 %s94, 1
          %s3021 = scalar_lea.sflag [#allocation3], %s3020
          %s3022 = sand.u32 %s94, 1
          %s3023 = scalar_lea.vmem [#allocation2], %s3022
          %3024 = dma.done %s3021, 16
        $region44: #{tpu_custom_call.1} parent=39 // pred_fallthru
          _
      $region40: #{tpu_custom_call.1} parent=5 // pred_fallthru
        _
    $region6: #{tpu_custom_call.1} parent=1 // loop_footer
      %s16 = sadd.s32 1, %s12
    $region7: #{tpu_custom_call.1} parent=1 // loop_footer_branch
      %11 = sbr.rel target = $region3
    $region8: #{tpu_custom_call.1} parent=1 // loop_exit
      _
    %3025 = vsyncpa [#allocation3], 1
    %s3026 = scalar_lea.sflag [#allocation3], 1
    %3027 = vsyncpa %s3026, 1

</llo_original>
